<compile_context>
chip_gen: v7x
topology: tpu7x:2x2x1
jax: 0.10.0
libtpu: 0.0.40
codegen_flags: <defaults>
</compile_context>

<pallas_src>
import functools

import jax
import jax.numpy as jnp
from jax.experimental import pallas as pl
from jax.experimental.pallas import tpu as pltpu

LANE = 128


def _round_up(n, m):
    return ((n + m - 1) // m) * m


# ----------------------------------------------------------------------------
# Fused Pallas kernel (single grid step over the whole batch)
# ----------------------------------------------------------------------------
def _fused_forward_kernel(targets_ref,        # SMEM (B,) int32  [scalar prefetch]
                          patches_ref,        # (B*HW, Kp) bf16  im2col rows
                          w1_ref, b1_ref,     # (Kp, Cp) bf16 / (1, Cp) f32
                          w2_ref, b2_ref,     # (Cp, Np) bf16 / (1, Np) f32
                          feat_ref,           # (B, num_classes, HW) f32
                          loss_ref,           # (1, 1) f32  mean NLL over batch
                          *, batch, hw, num_classes):
    # features(): conv3x3 (as im2col matmul) + bias + ReLU.  MXU, f32 accumulate.
    h1 = jnp.dot(patches_ref[...], w1_ref[...],
                 preferred_element_type=jnp.float32)              # (B*HW, Cp) f32
    h1 = jnp.maximum(h1 + b1_ref[...], 0.0)

    # Replaced "last_linear" as a 1x1 conv to num_classes (zero-padded lanes).
    logits = jnp.dot(h1.astype(jnp.bfloat16), w2_ref[...],
                     preferred_element_type=jnp.float32) + b2_ref[...]  # (B*HW, Np)

    n_p = logits.shape[-1]
    lane = jax.lax.broadcasted_iota(jnp.int32, (1, n_p), 1)
    valid = lane < num_classes                                    # mask padded lanes

    # NOTE: padded columns of w1p/w2p and padded bias entries are zero, so the
    # padded logits are exactly 0; the CE below additionally masks padded lanes,
    # so it stays correct even if that padding invariant changes.
    nll_sum = jnp.zeros((1, 1), jnp.float32)
    for i in range(batch):                                        # static unroll (B=2)
        rows = logits[i * hw:(i + 1) * hw, :]                     # (HW, Np) f32

        # Feature store: transpose (HW, Np) -> (Np, HW) in-kernel (XLU), keep
        # only the real classes (sublane slice); lane dim = HW (lane-dense).
        feat_ref[i, :, :] = rows.T[:num_classes, :].astype(feat_ref.dtype)

        # Loss branch: global-average-pool over spatial rows + softmax CE.
        pooled = jnp.mean(rows, axis=0, keepdims=True)            # (1, Np) f32
        masked = jnp.where(valid, pooled, -1e30)
        m = jnp.max(masked, axis=-1, keepdims=True)               # (1, 1)
        sum_exp = jnp.sum(jnp.where(valid, jnp.exp(masked - m), 0.0),
                          axis=-1, keepdims=True)
        lse = m + jnp.log(sum_exp)                                # (1, 1)

        tgt = targets_ref[i]                                      # SMEM scalar
        picked = jnp.sum(jnp.where(lane == tgt, pooled, 0.0),
                         axis=-1, keepdims=True)                  # (1, 1)
        nll_sum = nll_sum + (lse - picked)

    loss_ref[...] = nll_sum / batch


def fused_forward(patches, w1p, b1p, w2p, b2p, targets, *, batch, hw, num_classes):
    """One pallas_call, one grid step: features + mean pooled-CE loss.

    patches: (B*HW, Kp) bf16; weights/biases zero-padded to 128-lane widths.
    Returns (features (B, num_classes, HW) f32, loss (1, 1) f32).
    """
    m_rows, kp = patches.shape
    cp = w1p.shape[1]
    n_p = w2p.shape[1]

    flops = 2 * m_rows * kp * cp + 2 * m_rows * cp * n_p
    bytes_accessed = (patches.size * 2 + w1p.size * 2 + w2p.size * 2
                      + (b1p.size + b2p.size) * 4
                      + batch * num_classes * hw * 4 + 4)

    grid_spec = pltpu.PrefetchScalarGridSpec(
        num_scalar_prefetch=1,
        grid=(1,),
        in_specs=[
            pl.BlockSpec((m_rows, kp), lambda i, tgt: (0, 0)),   # patches (all rows)
            pl.BlockSpec((kp, cp), lambda i, tgt: (0, 0)),       # w1 (resident)
            pl.BlockSpec((1, cp), lambda i, tgt: (0, 0)),        # b1
            pl.BlockSpec((cp, n_p), lambda i, tgt: (0, 0)),      # w2 (resident)
            pl.BlockSpec((1, n_p), lambda i, tgt: (0, 0)),       # b2
        ],
        out_specs=[
            pl.BlockSpec((batch, num_classes, hw),
                         lambda i, tgt: (0, 0, 0)),               # features (B, nc, HW)
            pl.BlockSpec((1, 1), lambda i, tgt: (0, 0)),          # scalar loss
        ],
    )
    return pl.pallas_call(
        functools.partial(_fused_forward_kernel,
                          batch=batch, hw=hw, num_classes=num_classes),
        out_shape=(jax.ShapeDtypeStruct((batch, num_classes, hw), jnp.float32),
                   jax.ShapeDtypeStruct((1, 1), jnp.float32)),
        grid_spec=grid_spec,
        compiler_params=pltpu.CompilerParams(
            dimension_semantics=("arbitrary",)),
        cost_estimate=pl.CostEstimate(flops=flops,
                                      transcendentals=batch * n_p,
                                      bytes_accessed=bytes_accessed),
    )(targets, patches, w1p, b1p, w2p, b2p)


# ----------------------------------------------------------------------------
# Glue: im2col, parameter init, forward wrapper
# ----------------------------------------------------------------------------
def im2col_3x3_same(x_nhwc):
    """x: (B, H, W, C) -> patches (B*H*W, 9*C), zero-padded 'same' 3x3."""
    B, H, W, C = x_nhwc.shape
    xp = jnp.pad(x_nhwc, ((0, 0), (1, 1), (1, 1), (0, 0)))
    cols = [xp[:, dh:dh + H, dw:dw + W, :] for dh in range(3) for dw in range(3)]
    patches = jnp.concatenate(cols, axis=-1)            # (B, H, W, 9*C)
    return patches.reshape(B * H * W, 9 * C)


def init_params(key, c_in, c_mid, num_classes):
    k1, k2, k3, k4 = jax.random.split(key, 4)
    # conv1: 3x3, c_in -> c_mid (stored flattened for the im2col matmul)
    w1 = jax.random.normal(k1, (9 * c_in, c_mid), jnp.float32) * 0.1
    b1 = jax.random.normal(k2, (1, c_mid), jnp.float32) * 0.01
    # conv2 (the replaced "last_linear" as a 1x1 conv): c_mid -> num_classes
    w2 = jax.random.normal(k3, (c_mid, num_classes), jnp.float32) * 0.1
    b2 = jax.random.normal(k4, (1, num_classes), jnp.float32) * 0.01
    return {"w1": w1, "b1": b1, "w2": w2, "b2": b2}


def pretrained_model_forward(params, image_nchw, targets, num_classes):
    """Mirrors PretrainedModel.forward: returns (out_nchw, loss)."""
    B, C, H, W = image_nchw.shape
    k_raw = 9 * C
    c_mid = params["w1"].shape[1]
    kp = _round_up(k_raw, LANE)
    cp = _round_up(c_mid, LANE)
    ncp = _round_up(num_classes, LANE)

    # NCHW -> NHWC, 3x3 im2col; pad K (=36) up to 128 lanes; bf16 operands.
    x = jnp.transpose(image_nchw, (0, 2, 3, 1))
    patches = im2col_3x3_same(x)                                  # (B*H*W, 9C)
    patches = jnp.pad(patches, ((0, 0), (0, kp - k_raw))).astype(jnp.bfloat16)

    # Zero-pad channel dims to 128 lanes (exact math; padded lanes stay 0).
    w1p = jnp.pad(params["w1"],
                  ((0, kp - k_raw), (0, cp - c_mid))).astype(jnp.bfloat16)
    b1p = jnp.pad(params["b1"], ((0, 0), (0, cp - c_mid))).astype(jnp.float32)
    w2p = jnp.pad(params["w2"],
                  ((0, cp - c_mid), (0, ncp - num_classes))).astype(jnp.bfloat16)
    b2p = jnp.pad(params["b2"], ((0, 0), (0, ncp - num_classes))).astype(jnp.float32)

    feat, loss = fused_forward(patches, w1p, b1p, w2p, b2p,
                               targets.astype(jnp.int32),
                               batch=B, hw=H * W, num_classes=num_classes)

    out_nchw = feat.reshape(B, num_classes, H, W)    # channel-major already; no transpose
    return out_nchw, loss[0, 0]


# ----------------------------------------------------------------------------
if __name__ == "__main__":
    B, C_IN, H, W = 2, 4, 16, 16
    C_MID = 32
    NUM_CLASSES = 8

    key = jax.random.PRNGKey(0)
    k_img, k_tgt, k_par = jax.random.split(key, 3)

    image = jax.random.normal(k_img, (B, C_IN, H, W), jnp.float32)   # NCHW
    targets = jax.random.randint(k_tgt, (B,), 0, NUM_CLASSES)
    params = init_params(k_par, C_IN, C_MID, NUM_CLASSES)

    fwd = jax.jit(functools.partial(pretrained_model_forward,
                                    num_classes=NUM_CLASSES))
    out, loss = fwd(params, image, targets)
    jax.block_until_ready((out, loss))

    assert out.shape == (B, NUM_CLASSES, H, W)
    assert loss.shape == ()
    assert bool(jnp.isfinite(loss))
    print("KERNEL_OK")
</pallas_src>

<mosaic_0001>
module attributes {stable_mosaic.version = 11 : i64} {
  func.func @_fused_forward_kernel(%arg0: i32, %arg1: memref<2xi32, #tpu.memory_space<smem>>, %arg2: memref<512x128xbf16, #tpu.memory_space<vmem>>, %arg3: memref<128x128xbf16, #tpu.memory_space<vmem>>, %arg4: memref<1x128xf32, #tpu.memory_space<vmem>>, %arg5: memref<128x128xbf16, #tpu.memory_space<vmem>>, %arg6: memref<1x128xf32, #tpu.memory_space<vmem>>, %arg7: memref<2x8x256xf32, #tpu.memory_space<vmem>>, %arg8: memref<1x1xf32, #tpu.memory_space<vmem>>) attributes {dimension_semantics = [#tpu.dimension_semantics<arbitrary>], iteration_bounds = array<i64: 1>, scalar_prefetch = 1 : i64, scratch_operands = 0 : i64, tpu.core_type = #tpu.core_type<tc>, window_params = [{pipeline_mode = #tpu.pipeline_mode<synchronous>, transform_indices = @transform_0, window_bounds = array<i64: 512, 128>}, {pipeline_mode = #tpu.pipeline_mode<synchronous>, transform_indices = @transform_1, window_bounds = array<i64: 128, 128>}, {pipeline_mode = #tpu.pipeline_mode<synchronous>, transform_indices = @transform_2, window_bounds = array<i64: 1, 128>}, {pipeline_mode = #tpu.pipeline_mode<synchronous>, transform_indices = @transform_3, window_bounds = array<i64: 128, 128>}, {pipeline_mode = #tpu.pipeline_mode<synchronous>, transform_indices = @transform_4, window_bounds = array<i64: 1, 128>}, {pipeline_mode = #tpu.pipeline_mode<synchronous>, transform_indices = @transform_5, window_bounds = array<i64: 2, 8, 256>}, {pipeline_mode = #tpu.pipeline_mode<synchronous>, transform_indices = @transform_6, window_bounds = array<i64: 1, 1>}]} {
    %c0 = arith.constant 0 : index
    %c0_0 = arith.constant 0 : index
    %0 = vector.load %arg2[%c0, %c0_0] : memref<512x128xbf16, #tpu.memory_space<vmem>>, vector<512x128xbf16>
    %c0_1 = arith.constant 0 : index
    %c0_2 = arith.constant 0 : index
    %1 = vector.load %arg3[%c0_1, %c0_2] : memref<128x128xbf16, #tpu.memory_space<vmem>>, vector<128x128xbf16>
    %cst = arith.constant dense<0.000000e+00> : vector<512x128xf32>
    %2 = tpu.matmul %0, %1, %cst {dimension_numbers = #tpu.dot_dimension_numbers<[1], [0], [0], [1], [0, 0, 1, 1], [], []>} : vector<512x128xbf16>, vector<128x128xbf16>, vector<512x128xf32> -> vector<512x128xf32>
    %c0_3 = arith.constant 0 : index
    %c0_4 = arith.constant 0 : index
    %3 = vector.load %arg4[%c0_3, %c0_4] : memref<1x128xf32, #tpu.memory_space<vmem>>, vector<1x128xf32>
    %4 = vector.broadcast %3 : vector<1x128xf32> to vector<512x128xf32>
    %5 = arith.addf %2, %4 : vector<512x128xf32>
    %cst_5 = arith.constant 0.000000e+00 : f32
    %6 = vector.broadcast %cst_5 : f32 to vector<512x128xf32>
    %7 = arith.maximumf %5, %6 : vector<512x128xf32>
    %8 = arith.truncf %7 : vector<512x128xf32> to vector<512x128xbf16>
    %c0_6 = arith.constant 0 : index
    %c0_7 = arith.constant 0 : index
    %9 = vector.load %arg5[%c0_6, %c0_7] : memref<128x128xbf16, #tpu.memory_space<vmem>>, vector<128x128xbf16>
    %cst_8 = arith.constant dense<0.000000e+00> : vector<512x128xf32>
    %10 = tpu.matmul %8, %9, %cst_8 {dimension_numbers = #tpu.dot_dimension_numbers<[1], [0], [0], [1], [0, 0, 1, 1], [], []>} : vector<512x128xbf16>, vector<128x128xbf16>, vector<512x128xf32> -> vector<512x128xf32>
    %c0_9 = arith.constant 0 : index
    %c0_10 = arith.constant 0 : index
    %11 = vector.load %arg6[%c0_9, %c0_10] : memref<1x128xf32, #tpu.memory_space<vmem>>, vector<1x128xf32>
    %12 = vector.broadcast %11 : vector<1x128xf32> to vector<512x128xf32>
    %13 = arith.addf %10, %12 : vector<512x128xf32>
    %14 = tpu.iota {dimensions = array<i32: 1>} : vector<1x128xi32>
    %c8_i32 = arith.constant 8 : i32
    %15 = vector.broadcast %c8_i32 : i32 to vector<1x128xi32>
    %16 = arith.cmpi slt, %14, %15 : vector<1x128xi32>
    %cst_11 = arith.constant 0.000000e+00 : f32
    %17 = vector.broadcast %cst_11 : f32 to vector<1x1xf32>
    %18 = vector.extract_strided_slice %13 {offsets = [0, 0], sizes = [256, 128], strides = [1, 1]} : vector<512x128xf32> to vector<256x128xf32>
    %19 = tpu.transpose %18, [1, 0] : vector<256x128xf32> -> vector<128x256xf32>
    %20 = vector.extract_strided_slice %19 {offsets = [0, 0], sizes = [8, 256], strides = [1, 1]} : vector<128x256xf32> to vector<8x256xf32>
    %c0_12 = arith.constant 0 : index
    %c0_13 = arith.constant 0 : index
    %c0_14 = arith.constant 0 : index
    %21 = vector.load %arg7[%c0_12, %c0_13, %c0_14] : memref<2x8x256xf32, #tpu.memory_space<vmem>>, vector<1x8x256xf32>
    %22 = vector.shape_cast %21 : vector<1x8x256xf32> to vector<8x256xf32>
    %23 = vector.shape_cast %20 : vector<8x256xf32> to vector<1x8x256xf32>
    tpu.vector_store %arg7[%c0_12, %c0_13, %c0_14], %23 {strides = array<i32>} : memref<2x8x256xf32, #tpu.memory_space<vmem>>, vector<1x8x256xf32>,
    %cst_15 = arith.constant dense<0.000000e+00> : vector<128xf32>
    %24 = vector.multi_reduction <add>, %18, %cst_15 [0] : vector<256x128xf32> to vector<128xf32>
    %25 = vector.shape_cast %24 : vector<128xf32> to vector<1x128xf32>
    %cst_16 = arith.constant 2.560000e+02 : f32
    %26 = vector.broadcast %cst_16 : f32 to vector<1x128xf32>
    %27 = arith.divf %25, %26 : vector<1x128xf32>
    %cst_17 = arith.constant -1.000000e+30 : f32
    %28 = vector.broadcast %cst_17 : f32 to vector<1x128xf32>
    %29 = arith.select %16, %27, %28 : vector<1x128xi1>, vector<1x128xf32>
    %cst_18 = arith.constant dense<0xFF800000> : vector<1xf32>
    %30 = vector.multi_reduction <maximumf>, %29, %cst_18 [1] : vector<1x128xf32> to vector<1xf32>
    %31 = vector.shape_cast %30 : vector<1xf32> to vector<1x1xf32>
    %32 = vector.broadcast %31 : vector<1x1xf32> to vector<1x128xf32>
    %33 = arith.subf %29, %32 : vector<1x128xf32>
    %34 = math.exp %33 : vector<1x128xf32>
    %cst_19 = arith.constant 0.000000e+00 : f32
    %35 = vector.broadcast %cst_19 : f32 to vector<1x128xf32>
    %36 = arith.select %16, %34, %35 : vector<1x128xi1>, vector<1x128xf32>
    %cst_20 = arith.constant dense<0.000000e+00> : vector<1xf32>
    %37 = vector.multi_reduction <add>, %36, %cst_20 [1] : vector<1x128xf32> to vector<1xf32>
    %38 = vector.shape_cast %37 : vector<1xf32> to vector<1x1xf32>
    %39 = math.log %38 : vector<1x1xf32>
    %40 = arith.addf %31, %39 : vector<1x1xf32>
    %c0_21 = arith.constant 0 : index
    %41 = memref.load %arg1[%c0_21] : memref<2xi32, #tpu.memory_space<smem>>
    %42 = vector.broadcast %41 : i32 to vector<1x128xi32>
    %43 = arith.cmpi eq, %14, %42 : vector<1x128xi32>
    %cst_22 = arith.constant 0.000000e+00 : f32
    %44 = vector.broadcast %cst_22 : f32 to vector<1x128xf32>
    %45 = arith.select %43, %27, %44 : vector<1x128xi1>, vector<1x128xf32>
    %cst_23 = arith.constant dense<0.000000e+00> : vector<1xf32>
    %46 = vector.multi_reduction <add>, %45, %cst_23 [1] : vector<1x128xf32> to vector<1xf32>
    %47 = vector.shape_cast %46 : vector<1xf32> to vector<1x1xf32>
    %48 = arith.subf %40, %47 : vector<1x1xf32>
    %49 = arith.addf %17, %48 : vector<1x1xf32>
    %50 = vector.extract_strided_slice %13 {offsets = [256, 0], sizes = [256, 128], strides = [1, 1]} : vector<512x128xf32> to vector<256x128xf32>
    %51 = tpu.transpose %50, [1, 0] : vector<256x128xf32> -> vector<128x256xf32>
    %52 = vector.extract_strided_slice %51 {offsets = [0, 0], sizes = [8, 256], strides = [1, 1]} : vector<128x256xf32> to vector<8x256xf32>
    %c1 = arith.constant 1 : index
    %c0_24 = arith.constant 0 : index
    %c0_25 = arith.constant 0 : index
    %53 = vector.load %arg7[%c1, %c0_24, %c0_25] : memref<2x8x256xf32, #tpu.memory_space<vmem>>, vector<1x8x256xf32>
    %54 = vector.shape_cast %53 : vector<1x8x256xf32> to vector<8x256xf32>
    %55 = vector.shape_cast %52 : vector<8x256xf32> to vector<1x8x256xf32>
    tpu.vector_store %arg7[%c1, %c0_24, %c0_25], %55 {strides = array<i32>} : memref<2x8x256xf32, #tpu.memory_space<vmem>>, vector<1x8x256xf32>,
    %cst_26 = arith.constant dense<0.000000e+00> : vector<128xf32>
    %56 = vector.multi_reduction <add>, %50, %cst_26 [0] : vector<256x128xf32> to vector<128xf32>
    %57 = vector.shape_cast %56 : vector<128xf32> to vector<1x128xf32>
    %cst_27 = arith.constant 2.560000e+02 : f32
    %58 = vector.broadcast %cst_27 : f32 to vector<1x128xf32>
    %59 = arith.divf %57, %58 : vector<1x128xf32>
    %cst_28 = arith.constant -1.000000e+30 : f32
    %60 = vector.broadcast %cst_28 : f32 to vector<1x128xf32>
    %61 = arith.select %16, %59, %60 : vector<1x128xi1>, vector<1x128xf32>
    %cst_29 = arith.constant dense<0xFF800000> : vector<1xf32>
    %62 = vector.multi_reduction <maximumf>, %61, %cst_29 [1] : vector<1x128xf32> to vector<1xf32>
    %63 = vector.shape_cast %62 : vector<1xf32> to vector<1x1xf32>
    %64 = vector.broadcast %63 : vector<1x1xf32> to vector<1x128xf32>
    %65 = arith.subf %61, %64 : vector<1x128xf32>
    %66 = math.exp %65 : vector<1x128xf32>
    %cst_30 = arith.constant 0.000000e+00 : f32
    %67 = vector.broadcast %cst_30 : f32 to vector<1x128xf32>
    %68 = arith.select %16, %66, %67 : vector<1x128xi1>, vector<1x128xf32>
    %cst_31 = arith.constant dense<0.000000e+00> : vector<1xf32>
    %69 = vector.multi_reduction <add>, %68, %cst_31 [1] : vector<1x128xf32> to vector<1xf32>
    %70 = vector.shape_cast %69 : vector<1xf32> to vector<1x1xf32>
    %71 = math.log %70 : vector<1x1xf32>
    %72 = arith.addf %63, %71 : vector<1x1xf32>
    %c1_32 = arith.constant 1 : index
    %73 = memref.load %arg1[%c1_32] : memref<2xi32, #tpu.memory_space<smem>>
    %74 = vector.broadcast %73 : i32 to vector<1x128xi32>
    %75 = arith.cmpi eq, %14, %74 : vector<1x128xi32>
    %cst_33 = arith.constant 0.000000e+00 : f32
    %76 = vector.broadcast %cst_33 : f32 to vector<1x128xf32>
    %77 = arith.select %75, %59, %76 : vector<1x128xi1>, vector<1x128xf32>
    %cst_34 = arith.constant dense<0.000000e+00> : vector<1xf32>
    %78 = vector.multi_reduction <add>, %77, %cst_34 [1] : vector<1x128xf32> to vector<1xf32>
    %79 = vector.shape_cast %78 : vector<1xf32> to vector<1x1xf32>
    %80 = arith.subf %72, %79 : vector<1x1xf32>
    %81 = arith.addf %49, %80 : vector<1x1xf32>
    %cst_35 = arith.constant 2.000000e+00 : f32
    %82 = vector.broadcast %cst_35 : f32 to vector<1x1xf32>
    %83 = arith.divf %81, %82 : vector<1x1xf32>
    %c0_36 = arith.constant 0 : index
    %c0_37 = arith.constant 0 : index
    %84 = vector.load %arg8[%c0_36, %c0_37] : memref<1x1xf32, #tpu.memory_space<vmem>>, vector<1x1xf32>
    tpu.vector_store %arg8[%c0_36, %c0_37], %83 {strides = array<i32>} : memref<1x1xf32, #tpu.memory_space<vmem>>, vector<1x1xf32>,
    return
  }
  func.func @transform_0(%arg0: i32, %arg1: memref<2xi32, #tpu.memory_space<smem>>) -> (i32, i32) {
    %c0_i32 = arith.constant 0 : i32
    %c0_i32_0 = arith.constant 0 : i32
    %c0_i32_1 = arith.constant 0 : i32
    return %c0_i32, %c0_i32_0 : i32, i32
  }
  func.func @transform_1(%arg0: i32, %arg1: memref<2xi32, #tpu.memory_space<smem>>) -> (i32, i32) {
    %c0_i32 = arith.constant 0 : i32
    %c0_i32_0 = arith.constant 0 : i32
    %c0_i32_1 = arith.constant 0 : i32
    return %c0_i32, %c0_i32_0 : i32, i32
  }
  func.func @transform_2(%arg0: i32, %arg1: memref<2xi32, #tpu.memory_space<smem>>) -> (i32, i32) {
    %c0_i32 = arith.constant 0 : i32
    %c0_i32_0 = arith.constant 0 : i32
    %c0_i32_1 = arith.constant 0 : i32
    return %c0_i32, %c0_i32_0 : i32, i32
  }
  func.func @transform_3(%arg0: i32, %arg1: memref<2xi32, #tpu.memory_space<smem>>) -> (i32, i32) {
    %c0_i32 = arith.constant 0 : i32
    %c0_i32_0 = arith.constant 0 : i32
    %c0_i32_1 = arith.constant 0 : i32
    return %c0_i32, %c0_i32_0 : i32, i32
  }
  func.func @transform_4(%arg0: i32, %arg1: memref<2xi32, #tpu.memory_space<smem>>) -> (i32, i32) {
    %c0_i32 = arith.constant 0 : i32
    %c0_i32_0 = arith.constant 0 : i32
    %c0_i32_1 = arith.constant 0 : i32
    return %c0_i32, %c0_i32_0 : i32, i32
  }
  func.func @transform_5(%arg0: i32, %arg1: memref<2xi32, #tpu.memory_space<smem>>) -> (i32, i32, i32) {
    %c0_i32 = arith.constant 0 : i32
    %c0_i32_0 = arith.constant 0 : i32
    %c0_i32_1 = arith.constant 0 : i32
    %c0_i32_2 = arith.constant 0 : i32
    return %c0_i32, %c0_i32_0, %c0_i32_1 : i32, i32, i32
  }
  func.func @transform_6(%arg0: i32, %arg1: memref<2xi32, #tpu.memory_space<smem>>) -> (i32, i32) {
    %c0_i32 = arith.constant 0 : i32
    %c0_i32_0 = arith.constant 0 : i32
    %c0_i32_1 = arith.constant 0 : i32
    return %c0_i32, %c0_i32_0 : i32, i32
  }
}

</mosaic_0001>

<llo_original>
// kernel: pretrained_model_forward.1
$region0: #{pretrained_model_forward.1}
  #allocation0 [shape = 'u32[]', space=smem, size = 0x4, offset = 0x4, fixed_abs, tag = 'smem constant byte address 0x4 - core index']
  #allocation1 [shape = 'u32[144,128]{1,0:T(1,128)}', space=vmem, size = 0x12000, scoped, tag = 'internal scratch']
  #allocation2 [shape = 's32[1]{0}', space=sflag, size = 0x4, scoped, tag = 'scoped memory for pretrained_model_forward.1']
  #allocation3 [shape = 'u8[512]{0}', space=smem, size = 0x200, scoped, tag = 'prefetched SMEM operand 0']
  %s0 = inlined_call_operand.vmem [shape: s32[2], index: 0, kind: input, shape index: {}]
  %s1 = inlined_call_operand.vmem [shape: bf16[512,128], index: 1, kind: input, shape index: {}]
  %s2 = inlined_call_operand.vmem [shape: bf16[128,128], index: 2, kind: input, shape index: {}]
  %s3 = inlined_call_operand.vmem [shape: f32[1,128], index: 3, kind: input, shape index: {}]
  %s4 = inlined_call_operand.vmem [shape: bf16[128,128], index: 4, kind: input, shape index: {}]
  %s5 = inlined_call_operand.vmem [shape: f32[1,128], index: 5, kind: input, shape index: {}]
  %s6 = inlined_call_operand.vmem [shape: f32[2,8,256], index: 6, kind: output, shape index: {0}]
  %s7 = inlined_call_operand.hbm [shape: f32[1,1], index: 7, kind: output, shape index: {1}]
  %8 = xla_tuple %s6, %s7
  %s9 = sld [smem:[#allocation0]]
  $region38: #{pretrained_model_forward.1} parent=0
    _
  %s11 = ssub.s32 1, %s9
  %s12 = scalar_select 0, %s11, %s9
  %s13 = sshll.u32 %s0, 4
  %s14 = int_to_ptr.vmem [resolvable:$true] %s13
  %16 = dma.vmem_to_smem %s14, 16, [#allocation3], [#allocation2]
  %17 = dma.done [#allocation2], 16
  %18 = sfence
  $region1: #{pretrained_model_forward.1} parent=0
    #allocation4 [shape = 'u8[512]{0}', space=vmem, size = 0x400, scoped, tag = 'output window, operand 1, single buffered']
    #allocation5 [shape = 's32[1]{0}', space=sflag, size = 0x4, scoped, tag = 'scoped memory for pretrained_model_forward.1']
    %19 = vsyncpa [#allocation5], 0
    // Predicated region
    $region2: #{pretrained_model_forward.1} parent=1 // pred_check
      _
    $region3: #{pretrained_model_forward.1} parent=1 // pred_check_branch
      %21 = sbr.rel (0) target = $region5
    $region4: #{pretrained_model_forward.1} parent=1 // pred_region
      _
    $region5: #{pretrained_model_forward.1} parent=1 // pred_fallthru
      _
    // Predicated region
    $region6: #{pretrained_model_forward.1} parent=1 // pred_check
      _
    $region7: #{pretrained_model_forward.1} parent=1 // pred_check_branch
      %23 = sbr.rel (0) target = $region9
    $region8: #{pretrained_model_forward.1} parent=1 // pred_region
      _
    $region9: #{pretrained_model_forward.1} parent=1 // pred_fallthru
      _
    // Predicated region
    $region10: #{pretrained_model_forward.1} parent=1 // pred_check
      _
    $region11: #{pretrained_model_forward.1} parent=1 // pred_check_branch
      %25 = sbr.rel (0) target = $region13
    $region12: #{pretrained_model_forward.1} parent=1 // pred_region
      _
    $region13: #{pretrained_model_forward.1} parent=1 // pred_fallthru
      _
    // Predicated region
    $region14: #{pretrained_model_forward.1} parent=1 // pred_check
      _
    $region15: #{pretrained_model_forward.1} parent=1 // pred_check_branch
      %27 = sbr.rel (0) target = $region17
    $region16: #{pretrained_model_forward.1} parent=1 // pred_region
      _
    $region17: #{pretrained_model_forward.1} parent=1 // pred_fallthru
      _
    // Predicated region
    $region18: #{pretrained_model_forward.1} parent=1 // pred_check
      _
    $region19: #{pretrained_model_forward.1} parent=1 // pred_check_branch
      %29 = sbr.rel (0) target = $region21
    $region20: #{pretrained_model_forward.1} parent=1 // pred_region
      _
    $region21: #{pretrained_model_forward.1} parent=1 // pred_fallthru
      _
    %v31 = vld [vmem:[%s1] sm:$0xf]
    %v32 = vld [vmem:[%s1 + $0x4] sm:$0xf]
    %v33 = vld [vmem:[%s1 + $0x8] sm:$0xf]
    %v34 = vld [vmem:[%s1 + $0xc] sm:$0xf]
    %v35 = vld [vmem:[%s1 + $0x10] sm:$0xf]
    %v36 = vld [vmem:[%s1 + $0x14] sm:$0xf]
    %v37 = vld [vmem:[%s1 + $0x18] sm:$0xf]
    %v38 = vld [vmem:[%s1 + $0x1c] sm:$0xf]
    %v39 = vld [vmem:[%s1 + $0x20] sm:$0xf]
    %v40 = vld [vmem:[%s1 + $0x24] sm:$0xf]
    %v41 = vld [vmem:[%s1 + $0x28] sm:$0xf]
    %v42 = vld [vmem:[%s1 + $0x2c] sm:$0xf]
    %v43 = vld [vmem:[%s1 + $0x30] sm:$0xf]
    %v44 = vld [vmem:[%s1 + $0x34] sm:$0xf]
    %v45 = vld [vmem:[%s1 + $0x38] sm:$0xf]
    %v46 = vld [vmem:[%s1 + $0x3c] sm:$0xf]
    %v47 = vld [vmem:[%s1 + $0x40] sm:$0xf]
    %v48 = vld [vmem:[%s1 + $0x44] sm:$0xf]
    %v49 = vld [vmem:[%s1 + $0x48] sm:$0xf]
    %v50 = vld [vmem:[%s1 + $0x4c] sm:$0xf]
    %v51 = vld [vmem:[%s1 + $0x50] sm:$0xf]
    %v52 = vld [vmem:[%s1 + $0x54] sm:$0xf]
    %v53 = vld [vmem:[%s1 + $0x58] sm:$0xf]
    %v54 = vld [vmem:[%s1 + $0x5c] sm:$0xf]
    %v55 = vld [vmem:[%s1 + $0x60] sm:$0xf]
    %v56 = vld [vmem:[%s1 + $0x64] sm:$0xf]
    %v57 = vld [vmem:[%s1 + $0x68] sm:$0xf]
    %v58 = vld [vmem:[%s1 + $0x6c] sm:$0xf]
    %v59 = vld [vmem:[%s1 + $0x70] sm:$0xf]
    %v60 = vld [vmem:[%s1 + $0x74] sm:$0xf]
    %v61 = vld [vmem:[%s1 + $0x78] sm:$0xf]
    %v62 = vld [vmem:[%s1 + $0x7c] sm:$0xf]
    %v63 = vld [vmem:[%s1 + $0x80] sm:$0xf]
    %v64 = vld [vmem:[%s1 + $0x84] sm:$0xf]
    %v65 = vld [vmem:[%s1 + $0x88] sm:$0xf]
    %v66 = vld [vmem:[%s1 + $0x8c] sm:$0xf]
    %v67 = vld [vmem:[%s1 + $0x90] sm:$0xf]
    %v68 = vld [vmem:[%s1 + $0x94] sm:$0xf]
    %v69 = vld [vmem:[%s1 + $0x98] sm:$0xf]
    %v70 = vld [vmem:[%s1 + $0x9c] sm:$0xf]
    %v71 = vld [vmem:[%s1 + $0xa0] sm:$0xf]
    %v72 = vld [vmem:[%s1 + $0xa4] sm:$0xf]
    %v73 = vld [vmem:[%s1 + $0xa8] sm:$0xf]
    %v74 = vld [vmem:[%s1 + $0xac] sm:$0xf]
    %v75 = vld [vmem:[%s1 + $0xb0] sm:$0xf]
    %v76 = vld [vmem:[%s1 + $0xb4] sm:$0xf]
    %v77 = vld [vmem:[%s1 + $0xb8] sm:$0xf]
    %v78 = vld [vmem:[%s1 + $0xbc] sm:$0xf]
    %v79 = vld [vmem:[%s1 + $0xc0] sm:$0xf]
    %v80 = vld [vmem:[%s1 + $0xc4] sm:$0xf]
    %v81 = vld [vmem:[%s1 + $0xc8] sm:$0xf]
    %v82 = vld [vmem:[%s1 + $0xcc] sm:$0xf]
    %v83 = vld [vmem:[%s1 + $0xd0] sm:$0xf]
    %v84 = vld [vmem:[%s1 + $0xd4] sm:$0xf]
    %v85 = vld [vmem:[%s1 + $0xd8] sm:$0xf]
    %v86 = vld [vmem:[%s1 + $0xdc] sm:$0xf]
    %v87 = vld [vmem:[%s1 + $0xe0] sm:$0xf]
    %v88 = vld [vmem:[%s1 + $0xe4] sm:$0xf]
    %v89 = vld [vmem:[%s1 + $0xe8] sm:$0xf]
    %v90 = vld [vmem:[%s1 + $0xec] sm:$0xf]
    %v91 = vld [vmem:[%s1 + $0xf0] sm:$0xf]
    %v92 = vld [vmem:[%s1 + $0xf4] sm:$0xf]
    %v93 = vld [vmem:[%s1 + $0xf8] sm:$0xf]
    %v94 = vld [vmem:[%s1 + $0xfc] sm:$0xf]
    %v95 = vld [vmem:[%s2] sm:$0xf]
    %v96 = vld [vmem:[%s2 + $0x4] sm:$0xf]
    %v97 = vld [vmem:[%s2 + $0x8] sm:$0xf]
    %v98 = vld [vmem:[%s2 + $0xc] sm:$0xf]
    %v99 = vld [vmem:[%s2 + $0x10] sm:$0xf]
    %v100 = vld [vmem:[%s2 + $0x14] sm:$0xf]
    %v101 = vld [vmem:[%s2 + $0x18] sm:$0xf]
    %v102 = vld [vmem:[%s2 + $0x1c] sm:$0xf]
    %v103 = vld [vmem:[%s2 + $0x20] sm:$0xf]
    %v104 = vld [vmem:[%s2 + $0x24] sm:$0xf]
    %v105 = vld [vmem:[%s2 + $0x28] sm:$0xf]
    %v106 = vld [vmem:[%s2 + $0x2c] sm:$0xf]
    %v107 = vld [vmem:[%s2 + $0x30] sm:$0xf]
    %v108 = vld [vmem:[%s2 + $0x34] sm:$0xf]
    %v109 = vld [vmem:[%s2 + $0x38] sm:$0xf]
    %v110 = vld [vmem:[%s2 + $0x3c] sm:$0xf]
    %v111 = vld [vmem:[%s3] sm:$0x1]
    %v113 = vlaneseq
    %v114 = vshrl.u32 %v113, 7
    %v115 = vsub.s32 0, %v114
    %v116 = vrot.slane %v111, %v115
    %v182 = vunpack.c.l.b16 %v31
    %v183 = vunpack.c.l.b16 %v32
    %v184 = vunpack.c.l.b16 %v33
    %v185 = vunpack.c.l.b16 %v34
    %v186 = vunpack.c.l.b16 %v35
    %v187 = vunpack.c.l.b16 %v36
    %v188 = vunpack.c.l.b16 %v37
    %v189 = vunpack.c.l.b16 %v38
    %v190 = vunpack.c.l.b16 %v39
    %v191 = vunpack.c.l.b16 %v40
    %v192 = vunpack.c.l.b16 %v41
    %v193 = vunpack.c.l.b16 %v42
    %v194 = vunpack.c.l.b16 %v43
    %v195 = vunpack.c.l.b16 %v44
    %v196 = vunpack.c.l.b16 %v45
    %v197 = vunpack.c.l.b16 %v46
    %v198 = vunpack.c.l.b16 %v47
    %v199 = vunpack.c.l.b16 %v48
    %v200 = vunpack.c.l.b16 %v49
    %v201 = vunpack.c.l.b16 %v50
    %v202 = vunpack.c.l.b16 %v51
    %v203 = vunpack.c.l.b16 %v52
    %v204 = vunpack.c.l.b16 %v53
    %v205 = vunpack.c.l.b16 %v54
    %v206 = vunpack.c.l.b16 %v55
    %v207 = vunpack.c.l.b16 %v56
    %v208 = vunpack.c.l.b16 %v57
    %v209 = vunpack.c.l.b16 %v58
    %v210 = vunpack.c.l.b16 %v59
    %v211 = vunpack.c.l.b16 %v60
    %v212 = vunpack.c.l.b16 %v61
    %v213 = vunpack.c.l.b16 %v62
    %v214 = vunpack.c.l.b16 %v63
    %v215 = vunpack.c.l.b16 %v64
    %v216 = vunpack.c.l.b16 %v65
    %v217 = vunpack.c.l.b16 %v66
    %v218 = vunpack.c.l.b16 %v67
    %v219 = vunpack.c.l.b16 %v68
    %v220 = vunpack.c.l.b16 %v69
    %v221 = vunpack.c.l.b16 %v70
    %v222 = vunpack.c.l.b16 %v71
    %v223 = vunpack.c.l.b16 %v72
    %v224 = vunpack.c.l.b16 %v73
    %v225 = vunpack.c.l.b16 %v74
    %v226 = vunpack.c.l.b16 %v75
    %v227 = vunpack.c.l.b16 %v76
    %v228 = vunpack.c.l.b16 %v77
    %v229 = vunpack.c.l.b16 %v78
    %v230 = vunpack.c.l.b16 %v79
    %v231 = vunpack.c.l.b16 %v80
    %v232 = vunpack.c.l.b16 %v81
    %v233 = vunpack.c.l.b16 %v82
    %v234 = vunpack.c.l.b16 %v83
    %v235 = vunpack.c.l.b16 %v84
    %v236 = vunpack.c.l.b16 %v85
    %v237 = vunpack.c.l.b16 %v86
    %v238 = vunpack.c.l.b16 %v87
    %v239 = vunpack.c.l.b16 %v88
    %v240 = vunpack.c.l.b16 %v89
    %v241 = vunpack.c.l.b16 %v90
    %v242 = vunpack.c.l.b16 %v91
    %v243 = vunpack.c.l.b16 %v92
    %v244 = vunpack.c.l.b16 %v93
    %v245 = vunpack.c.l.b16 %v94
    %v246 = vpack.c.b16 %v183, %v182
    %v247 = vpack.c.b16 %v185, %v184
    %v248 = vpack.c.b16 %v187, %v186
    %v249 = vpack.c.b16 %v189, %v188
    %v250 = vpack.c.b16 %v191, %v190
    %v251 = vpack.c.b16 %v193, %v192
    %v252 = vpack.c.b16 %v195, %v194
    %v253 = vpack.c.b16 %v197, %v196
    %v254 = vpack.c.b16 %v199, %v198
    %v255 = vpack.c.b16 %v201, %v200
    %v256 = vpack.c.b16 %v203, %v202
    %v257 = vpack.c.b16 %v205, %v204
    %v258 = vpack.c.b16 %v207, %v206
    %v259 = vpack.c.b16 %v209, %v208
    %v260 = vpack.c.b16 %v211, %v210
    %v261 = vpack.c.b16 %v213, %v212
    %v262 = vpack.c.b16 %v215, %v214
    %v263 = vpack.c.b16 %v217, %v216
    %v264 = vpack.c.b16 %v219, %v218
    %v265 = vpack.c.b16 %v221, %v220
    %v266 = vpack.c.b16 %v223, %v222
    %v267 = vpack.c.b16 %v225, %v224
    %v268 = vpack.c.b16 %v227, %v226
    %v269 = vpack.c.b16 %v229, %v228
    %v270 = vpack.c.b16 %v231, %v230
    %v271 = vpack.c.b16 %v233, %v232
    %v272 = vpack.c.b16 %v235, %v234
    %v273 = vpack.c.b16 %v237, %v236
    %v274 = vpack.c.b16 %v239, %v238
    %v275 = vpack.c.b16 %v241, %v240
    %v276 = vpack.c.b16 %v243, %v242
    %v277 = vpack.c.b16 %v245, %v244
    %v326 = vunpack.c.l.b16 %v95
    %v327 = vunpack.c.l.b16 %v96
    %v328 = vunpack.c.l.b16 %v97
    %v329 = vunpack.c.l.b16 %v98
    %v330 = vunpack.c.l.b16 %v99
    %v331 = vunpack.c.l.b16 %v100
    %v332 = vunpack.c.l.b16 %v101
    %v333 = vunpack.c.l.b16 %v102
    %v334 = vunpack.c.l.b16 %v103
    %v335 = vunpack.c.l.b16 %v104
    %v336 = vunpack.c.l.b16 %v105
    %v337 = vunpack.c.l.b16 %v106
    %v338 = vunpack.c.l.b16 %v107
    %v339 = vunpack.c.l.b16 %v108
    %v340 = vunpack.c.l.b16 %v109
    %v341 = vunpack.c.l.b16 %v110
    %v342 = vpack.c.b16 %v327, %v326
    %v343 = vpack.c.b16 %v329, %v328
    %v344 = vpack.c.b16 %v331, %v330
    %v345 = vpack.c.b16 %v333, %v332
    %v346 = vpack.c.b16 %v335, %v334
    %v347 = vpack.c.b16 %v337, %v336
    %v348 = vpack.c.b16 %v339, %v338
    %v349 = vpack.c.b16 %v341, %v340
    %358 = vmatprep.subr.bf16.mxu0 0
    %359 = vmatpush1.bf16.msra.mxu0 %v342
    %360 = vmatprep.subr.bf16.mxu0 0
    %361 = vmatpush1.bf16.msra.mxu0 %v343
    %362 = vmatprep.subr.bf16.mxu0 0
    %363 = vmatpush1.bf16.msra.mxu0 %v344
    %364 = vmatprep.subr.bf16.mxu0 0
    %365 = vmatpush1.bf16.msra.mxu0 %v345
    %366 = vmatprep.subr.bf16.mxu0 0
    %367 = vmatpush1.bf16.msra.mxu0 %v346
    %368 = vmatprep.subr.bf16.mxu0 0
    %369 = vmatpush1.bf16.msra.mxu0 %v347
    %370 = vmatprep.subr.bf16.mxu0 0
    %371 = vmatpush1.bf16.msra.mxu0 %v348
    %372 = vmatprep.subr.bf16.mxu0 0
    %373 = vmatpush1.bf16.msra.mxu0 %v349
    %374 = vmatprep.subr.bf16.mxu0 0
    %375 = vmatpush1.bf16.msra.mxu0 0
    %376 = vmatprep.subr.bf16.mxu0 0
    %377 = vmatpush1.bf16.msra.mxu0 0
    %378 = vmatprep.subr.bf16.mxu0 0
    %379 = vmatpush1.bf16.msra.mxu0 0
    %380 = vmatprep.subr.bf16.mxu0 0
    %381 = vmatpush1.bf16.msra.mxu0 0
    %382 = vmatprep.subr.bf16.mxu0 0
    %383 = vmatpush1.bf16.msra.mxu0 0
    %384 = vmatprep.subr.bf16.mxu0 0
    %385 = vmatpush1.bf16.msra.mxu0 0
    %386 = vmatprep.subr.bf16.mxu0 0
    %387 = vmatpush1.bf16.msra.mxu0 0
    %388 = vmatprep.subr.bf16.mxu0 0
    %389 = vmatpush1.bf16.msra.mxu0 0
    %390 = vmatprep.mubr.bf16.mxu0 0
    %391 = vmatmul.mubr.bf16.gmra.mrb[0].mxu0 %v246
    %v392 = vpop.f32.mrb[0].mxu0
    %v393 = vadd.f32 %v116, %v392
    %v394 = vpop.f32.mrb[0].mxu0
    %v395 = vpop.f32.mrb[0].mxu0
    %v396 = vadd.f32 %v116, %v395
    %v397 = vpop.f32.mrb[0].mxu0
    %398 = vmatprep.mubr.bf16.mxu0 0
    %399 = vmatmul.mubr.bf16.gmra.mrb[0].mxu0 %v247
    %v400 = vpop.f32.mrb[0].mxu0
    %v401 = vadd.f32 %v116, %v400
    %v402 = vpop.f32.mrb[0].mxu0
    %v403 = vpop.f32.mrb[0].mxu0
    %v404 = vadd.f32 %v116, %v403
    %v405 = vpop.f32.mrb[0].mxu0
    %406 = vmatprep.mubr.bf16.mxu0 0
    %407 = vmatmul.mubr.bf16.gmra.mrb[0].mxu0 %v248
    %v408 = vpop.f32.mrb[0].mxu0
    %v409 = vadd.f32 %v116, %v408
    %v410 = vpop.f32.mrb[0].mxu0
    %v411 = vpop.f32.mrb[0].mxu0
    %v412 = vadd.f32 %v116, %v411
    %v413 = vpop.f32.mrb[0].mxu0
    %414 = vmatprep.mubr.bf16.mxu0 0
    %415 = vmatmul.mubr.bf16.gmra.mrb[0].mxu0 %v249
    %v416 = vpop.f32.mrb[0].mxu0
    %v417 = vadd.f32 %v116, %v416
    %v418 = vpop.f32.mrb[0].mxu0
    %v419 = vpop.f32.mrb[0].mxu0
    %v420 = vadd.f32 %v116, %v419
    %v421 = vpop.f32.mrb[0].mxu0
    %422 = vmatprep.mubr.bf16.mxu0 0
    %423 = vmatmul.mubr.bf16.gmra.mrb[0].mxu0 %v250
    %v424 = vpop.f32.mrb[0].mxu0
    %v425 = vadd.f32 %v116, %v424
    %v426 = vpop.f32.mrb[0].mxu0
    %v427 = vpop.f32.mrb[0].mxu0
    %v428 = vadd.f32 %v116, %v427
    %v429 = vpop.f32.mrb[0].mxu0
    %430 = vmatprep.mubr.bf16.mxu0 0
    %431 = vmatmul.mubr.bf16.gmra.mrb[0].mxu0 %v251
    %v432 = vpop.f32.mrb[0].mxu0
    %v433 = vadd.f32 %v116, %v432
    %v434 = vpop.f32.mrb[0].mxu0
    %v435 = vpop.f32.mrb[0].mxu0
    %v436 = vadd.f32 %v116, %v435
    %v437 = vpop.f32.mrb[0].mxu0
    %438 = vmatprep.mubr.bf16.mxu0 0
    %439 = vmatmul.mubr.bf16.gmra.mrb[0].mxu0 %v252
    %v440 = vpop.f32.mrb[0].mxu0
    %v441 = vadd.f32 %v116, %v440
    %v442 = vpop.f32.mrb[0].mxu0
    %v443 = vpop.f32.mrb[0].mxu0
    %v444 = vadd.f32 %v116, %v443
    %v445 = vpop.f32.mrb[0].mxu0
    %446 = vmatprep.mubr.bf16.mxu0 0
    %447 = vmatmul.mubr.bf16.gmra.mrb[0].mxu0 %v253
    %v448 = vpop.f32.mrb[0].mxu0
    %v449 = vadd.f32 %v116, %v448
    %v450 = vpop.f32.mrb[0].mxu0
    %v451 = vpop.f32.mrb[0].mxu0
    %v452 = vadd.f32 %v116, %v451
    %v453 = vpop.f32.mrb[0].mxu0
    %454 = vmatprep.mubr.bf16.mxu0 0
    %455 = vmatmul.mubr.bf16.gmra.mrb[0].mxu0 %v254
    %v456 = vpop.f32.mrb[0].mxu0
    %v457 = vadd.f32 %v116, %v456
    %v458 = vpop.f32.mrb[0].mxu0
    %v459 = vpop.f32.mrb[0].mxu0
    %v460 = vadd.f32 %v116, %v459
    %v461 = vpop.f32.mrb[0].mxu0
    %462 = vmatprep.mubr.bf16.mxu0 0
    %463 = vmatmul.mubr.bf16.gmra.mrb[0].mxu0 %v255
    %v464 = vpop.f32.mrb[0].mxu0
    %v465 = vadd.f32 %v116, %v464
    %v466 = vpop.f32.mrb[0].mxu0
    %v467 = vpop.f32.mrb[0].mxu0
    %v468 = vadd.f32 %v116, %v467
    %v469 = vpop.f32.mrb[0].mxu0
    %470 = vmatprep.mubr.bf16.mxu0 0
    %471 = vmatmul.mubr.bf16.gmra.mrb[0].mxu0 %v256
    %v472 = vpop.f32.mrb[0].mxu0
    %v473 = vadd.f32 %v116, %v472
    %v474 = vpop.f32.mrb[0].mxu0
    %v475 = vpop.f32.mrb[0].mxu0
    %v476 = vadd.f32 %v116, %v475
    %v477 = vpop.f32.mrb[0].mxu0
    %478 = vmatprep.mubr.bf16.mxu0 0
    %479 = vmatmul.mubr.bf16.gmra.mrb[0].mxu0 %v257
    %v480 = vpop.f32.mrb[0].mxu0
    %v481 = vadd.f32 %v116, %v480
    %v482 = vpop.f32.mrb[0].mxu0
    %v483 = vpop.f32.mrb[0].mxu0
    %v484 = vadd.f32 %v116, %v483
    %v485 = vpop.f32.mrb[0].mxu0
    %486 = vmatprep.mubr.bf16.mxu0 0
    %487 = vmatmul.mubr.bf16.gmra.mrb[0].mxu0 %v258
    %v488 = vpop.f32.mrb[0].mxu0
    %v489 = vadd.f32 %v116, %v488
    %v490 = vpop.f32.mrb[0].mxu0
    %v491 = vpop.f32.mrb[0].mxu0
    %v492 = vadd.f32 %v116, %v491
    %v493 = vpop.f32.mrb[0].mxu0
    %494 = vmatprep.mubr.bf16.mxu0 0
    %495 = vmatmul.mubr.bf16.gmra.mrb[0].mxu0 %v259
    %v496 = vpop.f32.mrb[0].mxu0
    %v497 = vadd.f32 %v116, %v496
    %v498 = vpop.f32.mrb[0].mxu0
    %v499 = vpop.f32.mrb[0].mxu0
    %v500 = vadd.f32 %v116, %v499
    %v501 = vpop.f32.mrb[0].mxu0
    %502 = vmatprep.mubr.bf16.mxu0 0
    %503 = vmatmul.mubr.bf16.gmra.mrb[0].mxu0 %v260
    %v504 = vpop.f32.mrb[0].mxu0
    %v505 = vadd.f32 %v116, %v504
    %v506 = vpop.f32.mrb[0].mxu0
    %v507 = vpop.f32.mrb[0].mxu0
    %v508 = vadd.f32 %v116, %v507
    %v509 = vpop.f32.mrb[0].mxu0
    %510 = vmatprep.mubr.bf16.mxu0 0
    %511 = vmatmul.mubr.bf16.gmra.mrb[0].mxu0 %v261
    %v512 = vpop.f32.mrb[0].mxu0
    %v513 = vadd.f32 %v116, %v512
    %v514 = vpop.f32.mrb[0].mxu0
    %v515 = vpop.f32.mrb[0].mxu0
    %v516 = vadd.f32 %v116, %v515
    %v517 = vpop.f32.mrb[0].mxu0
    %518 = vmatprep.mubr.bf16.mxu0 0
    %519 = vmatmul.mubr.bf16.gmra.mrb[0].mxu0 %v262
    %v520 = vpop.f32.mrb[0].mxu0
    %v521 = vadd.f32 %v116, %v520
    %v522 = vpop.f32.mrb[0].mxu0
    %v523 = vpop.f32.mrb[0].mxu0
    %v524 = vadd.f32 %v116, %v523
    %v525 = vpop.f32.mrb[0].mxu0
    %526 = vmatprep.mubr.bf16.mxu0 0
    %527 = vmatmul.mubr.bf16.gmra.mrb[0].mxu0 %v263
    %v528 = vpop.f32.mrb[0].mxu0
    %v529 = vadd.f32 %v116, %v528
    %v530 = vpop.f32.mrb[0].mxu0
    %v531 = vpop.f32.mrb[0].mxu0
    %v532 = vadd.f32 %v116, %v531
    %v533 = vpop.f32.mrb[0].mxu0
    %534 = vmatprep.mubr.bf16.mxu0 0
    %535 = vmatmul.mubr.bf16.gmra.mrb[0].mxu0 %v264
    %v536 = vpop.f32.mrb[0].mxu0
    %v537 = vadd.f32 %v116, %v536
    %v538 = vpop.f32.mrb[0].mxu0
    %v539 = vpop.f32.mrb[0].mxu0
    %v540 = vadd.f32 %v116, %v539
    %v541 = vpop.f32.mrb[0].mxu0
    %542 = vmatprep.mubr.bf16.mxu0 0
    %543 = vmatmul.mubr.bf16.gmra.mrb[0].mxu0 %v265
    %v544 = vpop.f32.mrb[0].mxu0
    %v545 = vadd.f32 %v116, %v544
    %v546 = vpop.f32.mrb[0].mxu0
    %v547 = vpop.f32.mrb[0].mxu0
    %v548 = vadd.f32 %v116, %v547
    %v549 = vpop.f32.mrb[0].mxu0
    %550 = vmatprep.mubr.bf16.mxu0 0
    %551 = vmatmul.mubr.bf16.gmra.mrb[0].mxu0 %v266
    %v552 = vpop.f32.mrb[0].mxu0
    %v553 = vadd.f32 %v116, %v552
    %v554 = vpop.f32.mrb[0].mxu0
    %v555 = vpop.f32.mrb[0].mxu0
    %v556 = vadd.f32 %v116, %v555
    %v557 = vpop.f32.mrb[0].mxu0
    %558 = vmatprep.mubr.bf16.mxu0 0
    %559 = vmatmul.mubr.bf16.gmra.mrb[0].mxu0 %v267
    %v560 = vpop.f32.mrb[0].mxu0
    %v561 = vadd.f32 %v116, %v560
    %v562 = vpop.f32.mrb[0].mxu0
    %v563 = vpop.f32.mrb[0].mxu0
    %v564 = vadd.f32 %v116, %v563
    %v565 = vpop.f32.mrb[0].mxu0
    %566 = vmatprep.mubr.bf16.mxu0 0
    %567 = vmatmul.mubr.bf16.gmra.mrb[0].mxu0 %v268
    %v568 = vpop.f32.mrb[0].mxu0
    %v569 = vadd.f32 %v116, %v568
    %v570 = vpop.f32.mrb[0].mxu0
    %v571 = vpop.f32.mrb[0].mxu0
    %v572 = vadd.f32 %v116, %v571
    %v573 = vpop.f32.mrb[0].mxu0
    %574 = vmatprep.mubr.bf16.mxu0 0
    %575 = vmatmul.mubr.bf16.gmra.mrb[0].mxu0 %v269
    %v576 = vpop.f32.mrb[0].mxu0
    %v577 = vadd.f32 %v116, %v576
    %v578 = vpop.f32.mrb[0].mxu0
    %v579 = vpop.f32.mrb[0].mxu0
    %v580 = vadd.f32 %v116, %v579
    %v581 = vpop.f32.mrb[0].mxu0
    %582 = vmatprep.mubr.bf16.mxu0 0
    %583 = vmatmul.mubr.bf16.gmra.mrb[0].mxu0 %v270
    %v584 = vpop.f32.mrb[0].mxu0
    %v585 = vadd.f32 %v116, %v584
    %v586 = vpop.f32.mrb[0].mxu0
    %v587 = vpop.f32.mrb[0].mxu0
    %v588 = vadd.f32 %v116, %v587
    %v589 = vpop.f32.mrb[0].mxu0
    %590 = vmatprep.mubr.bf16.mxu0 0
    %591 = vmatmul.mubr.bf16.gmra.mrb[0].mxu0 %v271
    %v592 = vpop.f32.mrb[0].mxu0
    %v593 = vadd.f32 %v116, %v592
    %v594 = vpop.f32.mrb[0].mxu0
    %v595 = vpop.f32.mrb[0].mxu0
    %v596 = vadd.f32 %v116, %v595
    %v597 = vpop.f32.mrb[0].mxu0
    %598 = vmatprep.mubr.bf16.mxu0 0
    %599 = vmatmul.mubr.bf16.gmra.mrb[0].mxu0 %v272
    %v600 = vpop.f32.mrb[0].mxu0
    %v601 = vadd.f32 %v116, %v600
    %v602 = vpop.f32.mrb[0].mxu0
    %v603 = vpop.f32.mrb[0].mxu0
    %v604 = vadd.f32 %v116, %v603
    %v605 = vpop.f32.mrb[0].mxu0
    %606 = vmatprep.mubr.bf16.mxu0 0
    %607 = vmatmul.mubr.bf16.gmra.mrb[0].mxu0 %v273
    %v608 = vpop.f32.mrb[0].mxu0
    %v609 = vadd.f32 %v116, %v608
    %v610 = vpop.f32.mrb[0].mxu0
    %v611 = vpop.f32.mrb[0].mxu0
    %v612 = vadd.f32 %v116, %v611
    %v613 = vpop.f32.mrb[0].mxu0
    %614 = vmatprep.mubr.bf16.mxu0 0
    %615 = vmatmul.mubr.bf16.gmra.mrb[0].mxu0 %v274
    %v616 = vpop.f32.mrb[0].mxu0
    %v617 = vadd.f32 %v116, %v616
    %v618 = vpop.f32.mrb[0].mxu0
    %v619 = vpop.f32.mrb[0].mxu0
    %v620 = vadd.f32 %v116, %v619
    %v621 = vpop.f32.mrb[0].mxu0
    %622 = vmatprep.mubr.bf16.mxu0 0
    %623 = vmatmul.mubr.bf16.gmra.mrb[0].mxu0 %v275
    %v624 = vpop.f32.mrb[0].mxu0
    %v625 = vadd.f32 %v116, %v624
    %v626 = vpop.f32.mrb[0].mxu0
    %v627 = vpop.f32.mrb[0].mxu0
    %v628 = vadd.f32 %v116, %v627
    %v629 = vpop.f32.mrb[0].mxu0
    %630 = vmatprep.mubr.bf16.mxu0 0
    %631 = vmatmul.mubr.bf16.gmra.mrb[0].mxu0 %v276
    %v632 = vpop.f32.mrb[0].mxu0
    %v633 = vadd.f32 %v116, %v632
    %v634 = vpop.f32.mrb[0].mxu0
    %v635 = vpop.f32.mrb[0].mxu0
    %v636 = vadd.f32 %v116, %v635
    %v637 = vpop.f32.mrb[0].mxu0
    %638 = vmatprep.mubr.bf16.mxu0 0
    %639 = vmatmul.mubr.bf16.gmra.mrb[0].mxu0 %v277
    %v640 = vpop.f32.mrb[0].mxu0
    %v641 = vadd.f32 %v116, %v640
    %v642 = vpop.f32.mrb[0].mxu0
    %v643 = vpop.f32.mrb[0].mxu0
    %v644 = vadd.f32 %v116, %v643
    %v645 = vpop.f32.mrb[0].mxu0
    %646 = vdwg.mxu0
    %v647 = vmax.f32 %v393, 0.0
    %v648 = vmax.f32 %v396, 0.0
    %v649 = vmax.f32 %v401, 0.0
    %v650 = vmax.f32 %v404, 0.0
    %v651 = vmax.f32 %v409, 0.0
    %v652 = vmax.f32 %v412, 0.0
    %v653 = vmax.f32 %v417, 0.0
    %v654 = vmax.f32 %v420, 0.0
    %v655 = vmax.f32 %v425, 0.0
    %v656 = vmax.f32 %v428, 0.0
    %v657 = vmax.f32 %v433, 0.0
    %v658 = vmax.f32 %v436, 0.0
    %v659 = vmax.f32 %v441, 0.0
    %v660 = vmax.f32 %v444, 0.0
    %v661 = vmax.f32 %v449, 0.0
    %v662 = vmax.f32 %v452, 0.0
    %v663 = vmax.f32 %v457, 0.0
    %v664 = vmax.f32 %v460, 0.0
    %v665 = vmax.f32 %v465, 0.0
    %v666 = vmax.f32 %v468, 0.0
    %v667 = vmax.f32 %v473, 0.0
    %v668 = vmax.f32 %v476, 0.0
    %v669 = vmax.f32 %v481, 0.0
    %v670 = vmax.f32 %v484, 0.0
    %v671 = vmax.f32 %v489, 0.0
    %v672 = vmax.f32 %v492, 0.0
    %v673 = vmax.f32 %v497, 0.0
    %v674 = vmax.f32 %v500, 0.0
    %v675 = vmax.f32 %v505, 0.0
    %v676 = vmax.f32 %v508, 0.0
    %v677 = vmax.f32 %v513, 0.0
    %v678 = vmax.f32 %v516, 0.0
    %v679 = vmax.f32 %v521, 0.0
    %v680 = vmax.f32 %v524, 0.0
    %v681 = vmax.f32 %v529, 0.0
    %v682 = vmax.f32 %v532, 0.0
    %v683 = vmax.f32 %v537, 0.0
    %v684 = vmax.f32 %v540, 0.0
    %v685 = vmax.f32 %v545, 0.0
    %v686 = vmax.f32 %v548, 0.0
    %v687 = vmax.f32 %v553, 0.0
    %v688 = vmax.f32 %v556, 0.0
    %v689 = vmax.f32 %v561, 0.0
    %v690 = vmax.f32 %v564, 0.0
    %v691 = vmax.f32 %v569, 0.0
    %v692 = vmax.f32 %v572, 0.0
    %v693 = vmax.f32 %v577, 0.0
    %v694 = vmax.f32 %v580, 0.0
    %v695 = vmax.f32 %v585, 0.0
    %v696 = vmax.f32 %v588, 0.0
    %v697 = vmax.f32 %v593, 0.0
    %v698 = vmax.f32 %v596, 0.0
    %v699 = vmax.f32 %v601, 0.0
    %v700 = vmax.f32 %v604, 0.0
    %v701 = vmax.f32 %v609, 0.0
    %v702 = vmax.f32 %v612, 0.0
    %v703 = vmax.f32 %v617, 0.0
    %v704 = vmax.f32 %v620, 0.0
    %v705 = vmax.f32 %v625, 0.0
    %v706 = vmax.f32 %v628, 0.0
    %v707 = vmax.f32 %v633, 0.0
    %v708 = vmax.f32 %v636, 0.0
    %v709 = vmax.f32 %v641, 0.0
    %v710 = vmax.f32 %v644, 0.0
    %v711 = vpack.c.bf16 %v648, %v647
    %v712 = vpack.c.bf16 %v650, %v649
    %v713 = vpack.c.bf16 %v652, %v651
    %v714 = vpack.c.bf16 %v654, %v653
    %v715 = vpack.c.bf16 %v656, %v655
    %v716 = vpack.c.bf16 %v658, %v657
    %v717 = vpack.c.bf16 %v660, %v659
    %v718 = vpack.c.bf16 %v662, %v661
    %v719 = vpack.c.bf16 %v664, %v663
    %v720 = vpack.c.bf16 %v666, %v665
    %v721 = vpack.c.bf16 %v668, %v667
    %v722 = vpack.c.bf16 %v670, %v669
    %v723 = vpack.c.bf16 %v672, %v671
    %v724 = vpack.c.bf16 %v674, %v673
    %v725 = vpack.c.bf16 %v676, %v675
    %v726 = vpack.c.bf16 %v678, %v677
    %v727 = vpack.c.bf16 %v680, %v679
    %v728 = vpack.c.bf16 %v682, %v681
    %v729 = vpack.c.bf16 %v684, %v683
    %v730 = vpack.c.bf16 %v686, %v685
    %v731 = vpack.c.bf16 %v688, %v687
    %v732 = vpack.c.bf16 %v690, %v689
    %v733 = vpack.c.bf16 %v692, %v691
    %v734 = vpack.c.bf16 %v694, %v693
    %v735 = vpack.c.bf16 %v696, %v695
    %v736 = vpack.c.bf16 %v698, %v697
    %v737 = vpack.c.bf16 %v700, %v699
    %v738 = vpack.c.bf16 %v702, %v701
    %v739 = vpack.c.bf16 %v704, %v703
    %v740 = vpack.c.bf16 %v706, %v705
    %v741 = vpack.c.bf16 %v708, %v707
    %v742 = vpack.c.bf16 %v710, %v709
    %v743 = vld [vmem:[%s4] sm:$0xf]
    %v744 = vld [vmem:[%s4 + $0x4] sm:$0xf]
    %v745 = vld [vmem:[%s4 + $0x8] sm:$0xf]
    %v746 = vld [vmem:[%s4 + $0xc] sm:$0xf]
    %v747 = vld [vmem:[%s4 + $0x10] sm:$0xf]
    %v748 = vld [vmem:[%s4 + $0x14] sm:$0xf]
    %v749 = vld [vmem:[%s4 + $0x18] sm:$0xf]
    %v750 = vld [vmem:[%s4 + $0x1c] sm:$0xf]
    %v751 = vld [vmem:[%s4 + $0x20] sm:$0xf]
    %v752 = vld [vmem:[%s4 + $0x24] sm:$0xf]
    %v753 = vld [vmem:[%s4 + $0x28] sm:$0xf]
    %v754 = vld [vmem:[%s4 + $0x2c] sm:$0xf]
    %v755 = vld [vmem:[%s4 + $0x30] sm:$0xf]
    %v756 = vld [vmem:[%s4 + $0x34] sm:$0xf]
    %v757 = vld [vmem:[%s4 + $0x38] sm:$0xf]
    %v758 = vld [vmem:[%s4 + $0x3c] sm:$0xf]
    %v759 = vld [vmem:[%s5] sm:$0x1]
    %v761 = vlaneseq
    %v762 = vshrl.u32 %v761, 7
    %v763 = vsub.s32 0, %v762
    %v764 = vrot.slane %v759, %v763
    %v782 = vunpack.c.l.b16 %v743
    %v783 = vunpack.c.l.b16 %v744
    %v784 = vunpack.c.l.b16 %v745
    %v785 = vunpack.c.l.b16 %v746
    %v786 = vunpack.c.l.b16 %v747
    %v787 = vunpack.c.l.b16 %v748
    %v788 = vunpack.c.l.b16 %v749
    %v789 = vunpack.c.l.b16 %v750
    %v790 = vunpack.c.l.b16 %v751
    %v791 = vunpack.c.l.b16 %v752
    %v792 = vunpack.c.l.b16 %v753
    %v793 = vunpack.c.l.b16 %v754
    %v794 = vunpack.c.l.b16 %v755
    %v795 = vunpack.c.l.b16 %v756
    %v796 = vunpack.c.l.b16 %v757
    %v797 = vunpack.c.l.b16 %v758
    %v798 = vpack.c.b16 %v783, %v782
    %v799 = vpack.c.b16 %v785, %v784
    %v800 = vpack.c.b16 %v787, %v786
    %v801 = vpack.c.b16 %v789, %v788
    %v802 = vpack.c.b16 %v791, %v790
    %v803 = vpack.c.b16 %v793, %v792
    %v804 = vpack.c.b16 %v795, %v794
    %v805 = vpack.c.b16 %v797, %v796
    %814 = vmatprep.subr.bf16.mxu0 0
    %815 = vmatpush1.bf16.msra.mxu0 %v798
    %816 = vmatprep.subr.bf16.mxu0 0
    %817 = vmatpush1.bf16.msra.mxu0 %v799
    %818 = vmatprep.subr.bf16.mxu0 0
    %819 = vmatpush1.bf16.msra.mxu0 %v800
    %820 = vmatprep.subr.bf16.mxu0 0
    %821 = vmatpush1.bf16.msra.mxu0 %v801
    %822 = vmatprep.subr.bf16.mxu0 0
    %823 = vmatpush1.bf16.msra.mxu0 %v802
    %824 = vmatprep.subr.bf16.mxu0 0
    %825 = vmatpush1.bf16.msra.mxu0 %v803
    %826 = vmatprep.subr.bf16.mxu0 0
    %827 = vmatpush1.bf16.msra.mxu0 %v804
    %828 = vmatprep.subr.bf16.mxu0 0
    %829 = vmatpush1.bf16.msra.mxu0 %v805
    %830 = vmatprep.subr.bf16.mxu0 0
    %831 = vmatpush1.bf16.msra.mxu0 0
    %832 = vmatprep.subr.bf16.mxu0 0
    %833 = vmatpush1.bf16.msra.mxu0 0
    %834 = vmatprep.subr.bf16.mxu0 0
    %835 = vmatpush1.bf16.msra.mxu0 0
    %836 = vmatprep.subr.bf16.mxu0 0
    %837 = vmatpush1.bf16.msra.mxu0 0
    %838 = vmatprep.subr.bf16.mxu0 0
    %839 = vmatpush1.bf16.msra.mxu0 0
    %840 = vmatprep.subr.bf16.mxu0 0
    %841 = vmatpush1.bf16.msra.mxu0 0
    %842 = vmatprep.subr.bf16.mxu0 0
    %843 = vmatpush1.bf16.msra.mxu0 0
    %844 = vmatprep.subr.bf16.mxu0 0
    %845 = vmatpush1.bf16.msra.mxu0 0
    %846 = vmatprep.mubr.bf16.mxu0 0
    %847 = vmatmul.mubr.bf16.gmra.mrb[0].mxu0 %v711
    %v848 = vpop.f32.mrb[0].mxu0
    %v849 = vadd.f32 %v764, %v848
    %v850 = vpop.f32.mrb[0].mxu0
    %v851 = vpop.f32.mrb[0].mxu0
    %v852 = vadd.f32 %v764, %v851
    %v853 = vpop.f32.mrb[0].mxu0
    %854 = vmatprep.mubr.bf16.mxu0 0
    %855 = vmatmul.mubr.bf16.gmra.mrb[0].mxu0 %v712
    %v856 = vpop.f32.mrb[0].mxu0
    %v857 = vadd.f32 %v764, %v856
    %v858 = vpop.f32.mrb[0].mxu0
    %v859 = vpop.f32.mrb[0].mxu0
    %v860 = vadd.f32 %v764, %v859
    %v861 = vpop.f32.mrb[0].mxu0
    %862 = vmatprep.mubr.bf16.mxu0 0
    %863 = vmatmul.mubr.bf16.gmra.mrb[0].mxu0 %v713
    %v864 = vpop.f32.mrb[0].mxu0
    %v865 = vadd.f32 %v764, %v864
    %v866 = vpop.f32.mrb[0].mxu0
    %v867 = vpop.f32.mrb[0].mxu0
    %v868 = vadd.f32 %v764, %v867
    %v869 = vpop.f32.mrb[0].mxu0
    %870 = vmatprep.mubr.bf16.mxu0 0
    %871 = vmatmul.mubr.bf16.gmra.mrb[0].mxu0 %v714
    %v872 = vpop.f32.mrb[0].mxu0
    %v873 = vadd.f32 %v764, %v872
    %v874 = vpop.f32.mrb[0].mxu0
    %v875 = vpop.f32.mrb[0].mxu0
    %v876 = vadd.f32 %v764, %v875
    %v877 = vpop.f32.mrb[0].mxu0
    %878 = vmatprep.mubr.bf16.mxu0 0
    %879 = vmatmul.mubr.bf16.gmra.mrb[0].mxu0 %v715
    %v880 = vpop.f32.mrb[0].mxu0
    %v881 = vadd.f32 %v764, %v880
    %v882 = vpop.f32.mrb[0].mxu0
    %v883 = vpop.f32.mrb[0].mxu0
    %v884 = vadd.f32 %v764, %v883
    %v885 = vpop.f32.mrb[0].mxu0
    %886 = vmatprep.mubr.bf16.mxu0 0
    %887 = vmatmul.mubr.bf16.gmra.mrb[0].mxu0 %v716
    %v888 = vpop.f32.mrb[0].mxu0
    %v889 = vadd.f32 %v764, %v888
    %v890 = vpop.f32.mrb[0].mxu0
    %v891 = vpop.f32.mrb[0].mxu0
    %v892 = vadd.f32 %v764, %v891
    %v893 = vpop.f32.mrb[0].mxu0
    %894 = vmatprep.mubr.bf16.mxu0 0
    %895 = vmatmul.mubr.bf16.gmra.mrb[0].mxu0 %v717
    %v896 = vpop.f32.mrb[0].mxu0
    %v897 = vadd.f32 %v764, %v896
    %v898 = vpop.f32.mrb[0].mxu0
    %v899 = vpop.f32.mrb[0].mxu0
    %v900 = vadd.f32 %v764, %v899
    %v901 = vpop.f32.mrb[0].mxu0
    %902 = vmatprep.mubr.bf16.mxu0 0
    %903 = vmatmul.mubr.bf16.gmra.mrb[0].mxu0 %v718
    %v904 = vpop.f32.mrb[0].mxu0
    %v905 = vadd.f32 %v764, %v904
    %v906 = vpop.f32.mrb[0].mxu0
    %v907 = vpop.f32.mrb[0].mxu0
    %v908 = vadd.f32 %v764, %v907
    %v909 = vpop.f32.mrb[0].mxu0
    %910 = vmatprep.mubr.bf16.mxu0 0
    %911 = vmatmul.mubr.bf16.gmra.mrb[0].mxu0 %v719
    %v912 = vpop.f32.mrb[0].mxu0
    %v913 = vadd.f32 %v764, %v912
    %v914 = vpop.f32.mrb[0].mxu0
    %v915 = vpop.f32.mrb[0].mxu0
    %v916 = vadd.f32 %v764, %v915
    %v917 = vpop.f32.mrb[0].mxu0
    %918 = vmatprep.mubr.bf16.mxu0 0
    %919 = vmatmul.mubr.bf16.gmra.mrb[0].mxu0 %v720
    %v920 = vpop.f32.mrb[0].mxu0
    %v921 = vadd.f32 %v764, %v920
    %v922 = vpop.f32.mrb[0].mxu0
    %v923 = vpop.f32.mrb[0].mxu0
    %v924 = vadd.f32 %v764, %v923
    %v925 = vpop.f32.mrb[0].mxu0
    %926 = vmatprep.mubr.bf16.mxu0 0
    %927 = vmatmul.mubr.bf16.gmra.mrb[0].mxu0 %v721
    %v928 = vpop.f32.mrb[0].mxu0
    %v929 = vadd.f32 %v764, %v928
    %v930 = vpop.f32.mrb[0].mxu0
    %v931 = vpop.f32.mrb[0].mxu0
    %v932 = vadd.f32 %v764, %v931
    %v933 = vpop.f32.mrb[0].mxu0
    %934 = vmatprep.mubr.bf16.mxu0 0
    %935 = vmatmul.mubr.bf16.gmra.mrb[0].mxu0 %v722
    %v936 = vpop.f32.mrb[0].mxu0
    %v937 = vadd.f32 %v764, %v936
    %v938 = vpop.f32.mrb[0].mxu0
    %v939 = vpop.f32.mrb[0].mxu0
    %v940 = vadd.f32 %v764, %v939
    %v941 = vpop.f32.mrb[0].mxu0
    %942 = vmatprep.mubr.bf16.mxu0 0
    %943 = vmatmul.mubr.bf16.gmra.mrb[0].mxu0 %v723
    %v944 = vpop.f32.mrb[0].mxu0
    %v945 = vadd.f32 %v764, %v944
    %v946 = vpop.f32.mrb[0].mxu0
    %v947 = vpop.f32.mrb[0].mxu0
    %v948 = vadd.f32 %v764, %v947
    %v949 = vpop.f32.mrb[0].mxu0
    %950 = vmatprep.mubr.bf16.mxu0 0
    %951 = vmatmul.mubr.bf16.gmra.mrb[0].mxu0 %v724
    %v952 = vpop.f32.mrb[0].mxu0
    %v953 = vadd.f32 %v764, %v952
    %v954 = vpop.f32.mrb[0].mxu0
    %v955 = vpop.f32.mrb[0].mxu0
    %v956 = vadd.f32 %v764, %v955
    %v957 = vpop.f32.mrb[0].mxu0
    %958 = vmatprep.mubr.bf16.mxu0 0
    %959 = vmatmul.mubr.bf16.gmra.mrb[0].mxu0 %v725
    %v960 = vpop.f32.mrb[0].mxu0
    %v961 = vadd.f32 %v764, %v960
    %v962 = vpop.f32.mrb[0].mxu0
    %v963 = vpop.f32.mrb[0].mxu0
    %v964 = vadd.f32 %v764, %v963
    %v965 = vpop.f32.mrb[0].mxu0
    %966 = vmatprep.mubr.bf16.mxu0 0
    %967 = vmatmul.mubr.bf16.gmra.mrb[0].mxu0 %v726
    %v968 = vpop.f32.mrb[0].mxu0
    %v969 = vadd.f32 %v764, %v968
    %v970 = vpop.f32.mrb[0].mxu0
    %v971 = vpop.f32.mrb[0].mxu0
    %v972 = vadd.f32 %v764, %v971
    %v973 = vpop.f32.mrb[0].mxu0
    %974 = vmatprep.mubr.bf16.mxu0 0
    %975 = vmatmul.mubr.bf16.gmra.mrb[0].mxu0 %v727
    %v976 = vpop.f32.mrb[0].mxu0
    %v977 = vadd.f32 %v764, %v976
    %v978 = vpop.f32.mrb[0].mxu0
    %v979 = vpop.f32.mrb[0].mxu0
    %v980 = vadd.f32 %v764, %v979
    %v981 = vpop.f32.mrb[0].mxu0
    %982 = vmatprep.mubr.bf16.mxu0 0
    %983 = vmatmul.mubr.bf16.gmra.mrb[0].mxu0 %v728
    %v984 = vpop.f32.mrb[0].mxu0
    %v985 = vadd.f32 %v764, %v984
    %v986 = vpop.f32.mrb[0].mxu0
    %v987 = vpop.f32.mrb[0].mxu0
    %v988 = vadd.f32 %v764, %v987
    %v989 = vpop.f32.mrb[0].mxu0
    %990 = vmatprep.mubr.bf16.mxu0 0
    %991 = vmatmul.mubr.bf16.gmra.mrb[0].mxu0 %v729
    %v992 = vpop.f32.mrb[0].mxu0
    %v993 = vadd.f32 %v764, %v992
    %v994 = vpop.f32.mrb[0].mxu0
    %v995 = vpop.f32.mrb[0].mxu0
    %v996 = vadd.f32 %v764, %v995
    %v997 = vpop.f32.mrb[0].mxu0
    %998 = vmatprep.mubr.bf16.mxu0 0
    %999 = vmatmul.mubr.bf16.gmra.mrb[0].mxu0 %v730
    %v1000 = vpop.f32.mrb[0].mxu0
    %v1001 = vadd.f32 %v764, %v1000
    %v1002 = vpop.f32.mrb[0].mxu0
    %v1003 = vpop.f32.mrb[0].mxu0
    %v1004 = vadd.f32 %v764, %v1003
    %v1005 = vpop.f32.mrb[0].mxu0
    %1006 = vmatprep.mubr.bf16.mxu0 0
    %1007 = vmatmul.mubr.bf16.gmra.mrb[0].mxu0 %v731
    %v1008 = vpop.f32.mrb[0].mxu0
    %v1009 = vadd.f32 %v764, %v1008
    %v1010 = vpop.f32.mrb[0].mxu0
    %v1011 = vpop.f32.mrb[0].mxu0
    %v1012 = vadd.f32 %v764, %v1011
    %v1013 = vpop.f32.mrb[0].mxu0
    %1014 = vmatprep.mubr.bf16.mxu0 0
    %1015 = vmatmul.mubr.bf16.gmra.mrb[0].mxu0 %v732
    %v1016 = vpop.f32.mrb[0].mxu0
    %v1017 = vadd.f32 %v764, %v1016
    %v1018 = vpop.f32.mrb[0].mxu0
    %v1019 = vpop.f32.mrb[0].mxu0
    %v1020 = vadd.f32 %v764, %v1019
    %v1021 = vpop.f32.mrb[0].mxu0
    %1022 = vmatprep.mubr.bf16.mxu0 0
    %1023 = vmatmul.mubr.bf16.gmra.mrb[0].mxu0 %v733
    %v1024 = vpop.f32.mrb[0].mxu0
    %v1025 = vadd.f32 %v764, %v1024
    %v1026 = vpop.f32.mrb[0].mxu0
    %v1027 = vpop.f32.mrb[0].mxu0
    %v1028 = vadd.f32 %v764, %v1027
    %v1029 = vpop.f32.mrb[0].mxu0
    %1030 = vmatprep.mubr.bf16.mxu0 0
    %1031 = vmatmul.mubr.bf16.gmra.mrb[0].mxu0 %v734
    %v1032 = vpop.f32.mrb[0].mxu0
    %v1033 = vadd.f32 %v764, %v1032
    %v1034 = vpop.f32.mrb[0].mxu0
    %v1035 = vpop.f32.mrb[0].mxu0
    %v1036 = vadd.f32 %v764, %v1035
    %v1037 = vpop.f32.mrb[0].mxu0
    %1038 = vmatprep.mubr.bf16.mxu0 0
    %1039 = vmatmul.mubr.bf16.gmra.mrb[0].mxu0 %v735
    %v1040 = vpop.f32.mrb[0].mxu0
    %v1041 = vadd.f32 %v764, %v1040
    %v1042 = vpop.f32.mrb[0].mxu0
    %v1043 = vpop.f32.mrb[0].mxu0
    %v1044 = vadd.f32 %v764, %v1043
    %v1045 = vpop.f32.mrb[0].mxu0
    %1046 = vmatprep.mubr.bf16.mxu0 0
    %1047 = vmatmul.mubr.bf16.gmra.mrb[0].mxu0 %v736
    %v1048 = vpop.f32.mrb[0].mxu0
    %v1049 = vadd.f32 %v764, %v1048
    %v1050 = vpop.f32.mrb[0].mxu0
    %v1051 = vpop.f32.mrb[0].mxu0
    %v1052 = vadd.f32 %v764, %v1051
    %v1053 = vpop.f32.mrb[0].mxu0
    %1054 = vmatprep.mubr.bf16.mxu0 0
    %1055 = vmatmul.mubr.bf16.gmra.mrb[0].mxu0 %v737
    %v1056 = vpop.f32.mrb[0].mxu0
    %v1057 = vadd.f32 %v764, %v1056
    %v1058 = vpop.f32.mrb[0].mxu0
    %v1059 = vpop.f32.mrb[0].mxu0
    %v1060 = vadd.f32 %v764, %v1059
    %v1061 = vpop.f32.mrb[0].mxu0
    %1062 = vmatprep.mubr.bf16.mxu0 0
    %1063 = vmatmul.mubr.bf16.gmra.mrb[0].mxu0 %v738
    %v1064 = vpop.f32.mrb[0].mxu0
    %v1065 = vadd.f32 %v764, %v1064
    %v1066 = vpop.f32.mrb[0].mxu0
    %v1067 = vpop.f32.mrb[0].mxu0
    %v1068 = vadd.f32 %v764, %v1067
    %v1069 = vpop.f32.mrb[0].mxu0
    %1070 = vmatprep.mubr.bf16.mxu0 0
    %1071 = vmatmul.mubr.bf16.gmra.mrb[0].mxu0 %v739
    %v1072 = vpop.f32.mrb[0].mxu0
    %v1073 = vadd.f32 %v764, %v1072
    %v1074 = vpop.f32.mrb[0].mxu0
    %v1075 = vpop.f32.mrb[0].mxu0
    %v1076 = vadd.f32 %v764, %v1075
    %v1077 = vpop.f32.mrb[0].mxu0
    %1078 = vmatprep.mubr.bf16.mxu0 0
    %1079 = vmatmul.mubr.bf16.gmra.mrb[0].mxu0 %v740
    %v1080 = vpop.f32.mrb[0].mxu0
    %v1081 = vadd.f32 %v764, %v1080
    %v1082 = vpop.f32.mrb[0].mxu0
    %v1083 = vpop.f32.mrb[0].mxu0
    %v1084 = vadd.f32 %v764, %v1083
    %v1085 = vpop.f32.mrb[0].mxu0
    %1086 = vmatprep.mubr.bf16.mxu0 0
    %1087 = vmatmul.mubr.bf16.gmra.mrb[0].mxu0 %v741
    %v1088 = vpop.f32.mrb[0].mxu0
    %v1089 = vadd.f32 %v764, %v1088
    %v1090 = vpop.f32.mrb[0].mxu0
    %v1091 = vpop.f32.mrb[0].mxu0
    %v1092 = vadd.f32 %v764, %v1091
    %v1093 = vpop.f32.mrb[0].mxu0
    %1094 = vmatprep.mubr.bf16.mxu0 0
    %1095 = vmatmul.mubr.bf16.gmra.mrb[0].mxu0 %v742
    %v1096 = vpop.f32.mrb[0].mxu0
    %v1097 = vadd.f32 %v764, %v1096
    %v1098 = vpop.f32.mrb[0].mxu0
    %v1099 = vpop.f32.mrb[0].mxu0
    %v1100 = vadd.f32 %v764, %v1099
    %v1101 = vpop.f32.mrb[0].mxu0
    %1102 = vdwg.mxu0
    %v1103 = vlaneseq
    %v1104 = vand.u32 %v1103, 127
    %vm1105 = vcmp.lt.s32.totalorder %v1104, 8
    %1106 = vxpose.xlu0.b32.start [1/16] %v849, 128
    %1107 = vxpose.xlu0.b32.cont [2/16] %v852, 128
    %1108 = vxpose.xlu0.b32.cont [3/16] %v857, 128
    %1109 = vxpose.xlu0.b32.cont [4/16] %v860, 128
    %1110 = vxpose.xlu0.b32.cont [5/16] %v865, 128
    %1111 = vxpose.xlu0.b32.cont [6/16] %v868, 128
    %1112 = vxpose.xlu0.b32.cont [7/16] %v873, 128
    %1113 = vxpose.xlu0.b32.cont [8/16] %v876, 128
    %1114 = vxpose.xlu0.b32.cont [9/16] %v881, 128
    %1115 = vxpose.xlu0.b32.cont [10/16] %v884, 128
    %1116 = vxpose.xlu0.b32.cont [11/16] %v889, 128
    %1117 = vxpose.xlu0.b32.cont [12/16] %v892, 128
    %1118 = vxpose.xlu0.b32.cont [13/16] %v897, 128
    %1119 = vxpose.xlu0.b32.cont [14/16] %v900, 128
    %1120 = vxpose.xlu0.b32.cont [15/16] %v905, 128
    %1121 = vxpose.xlu0.b32.end [16/16] %v908, 128
    %v1122 = vpop.trf.xlu0
    %v1123 = vpop.trf.xlu0
    %v1124 = vpop.trf.xlu0
    %v1125 = vpop.trf.xlu0
    %v1126 = vpop.trf.xlu0
    %v1127 = vpop.trf.xlu0
    %v1128 = vpop.trf.xlu0
    %v1129 = vpop.trf.xlu0
    %v1130 = vpop.trf.xlu0
    %v1131 = vpop.trf.xlu0
    %v1132 = vpop.trf.xlu0
    %v1133 = vpop.trf.xlu0
    %v1134 = vpop.trf.xlu0
    %v1135 = vpop.trf.xlu0
    %v1136 = vpop.trf.xlu0
    %v1137 = vpop.trf.xlu0
    %1138 = vxpose.xlu0.b32.start [1/16] %v913, 128
    %1139 = vxpose.xlu0.b32.cont [2/16] %v916, 128
    %1140 = vxpose.xlu0.b32.cont [3/16] %v921, 128
    %1141 = vxpose.xlu0.b32.cont [4/16] %v924, 128
    %1142 = vxpose.xlu0.b32.cont [5/16] %v929, 128
    %1143 = vxpose.xlu0.b32.cont [6/16] %v932, 128
    %1144 = vxpose.xlu0.b32.cont [7/16] %v937, 128
    %1145 = vxpose.xlu0.b32.cont [8/16] %v940, 128
    %1146 = vxpose.xlu0.b32.cont [9/16] %v945, 128
    %1147 = vxpose.xlu0.b32.cont [10/16] %v948, 128
    %1148 = vxpose.xlu0.b32.cont [11/16] %v953, 128
    %1149 = vxpose.xlu0.b32.cont [12/16] %v956, 128
    %1150 = vxpose.xlu0.b32.cont [13/16] %v961, 128
    %1151 = vxpose.xlu0.b32.cont [14/16] %v964, 128
    %1152 = vxpose.xlu0.b32.cont [15/16] %v969, 128
    %1153 = vxpose.xlu0.b32.end [16/16] %v972, 128
    %v1154 = vpop.trf.xlu0
    %v1155 = vpop.trf.xlu0
    %v1156 = vpop.trf.xlu0
    %v1157 = vpop.trf.xlu0
    %v1158 = vpop.trf.xlu0
    %v1159 = vpop.trf.xlu0
    %v1160 = vpop.trf.xlu0
    %v1161 = vpop.trf.xlu0
    %v1162 = vpop.trf.xlu0
    %v1163 = vpop.trf.xlu0
    %v1164 = vpop.trf.xlu0
    %v1165 = vpop.trf.xlu0
    %v1166 = vpop.trf.xlu0
    %v1167 = vpop.trf.xlu0
    %v1168 = vpop.trf.xlu0
    %v1169 = vpop.trf.xlu0
    %1170 = vst [vmem:[%s6] sm:$0xff] %v1122
    %1171 = vst [vmem:[%s6 + $0x8] sm:$0xff] %v1154
    %v1172 = vadd.f32 %v849, %v852
    %v1173 = vadd.f32 %v1172, %v857
    %v1174 = vadd.f32 %v1173, %v860
    %v1175 = vadd.f32 %v1174, %v865
    %v1176 = vadd.f32 %v1175, %v868
    %v1177 = vadd.f32 %v1176, %v873
    %v1178 = vadd.f32 %v1177, %v876
    %v1179 = vadd.f32 %v1178, %v881
    %v1180 = vadd.f32 %v1179, %v884
    %v1181 = vadd.f32 %v1180, %v889
    %v1182 = vadd.f32 %v1181, %v892
    %v1183 = vadd.f32 %v1182, %v897
    %v1184 = vadd.f32 %v1183, %v900
    %v1185 = vadd.f32 %v1184, %v905
    %v1186 = vadd.f32 %v1185, %v908
    %v1187 = vadd.f32 %v1186, %v913
    %v1188 = vadd.f32 %v1187, %v916
    %v1189 = vadd.f32 %v1188, %v921
    %v1190 = vadd.f32 %v1189, %v924
    %v1191 = vadd.f32 %v1190, %v929
    %v1192 = vadd.f32 %v1191, %v932
    %v1193 = vadd.f32 %v1192, %v937
    %v1194 = vadd.f32 %v1193, %v940
    %v1195 = vadd.f32 %v1194, %v945
    %v1196 = vadd.f32 %v1195, %v948
    %v1197 = vadd.f32 %v1196, %v953
    %v1198 = vadd.f32 %v1197, %v956
    %v1199 = vadd.f32 %v1198, %v961
    %v1200 = vadd.f32 %v1199, %v964
    %v1201 = vadd.f32 %v1200, %v969
    %v1202 = vadd.f32 %v1201, %v972
    %v1203 = vrot.slane %v1202, 4
    %v1204 = vadd.f32 %v1202, %v1203
    %v1205 = vrot.slane %v1204, 2
    %v1206 = vadd.f32 %v1204, %v1205
    %v1207 = vrot.slane %v1206, 1
    %v1208 = vadd.f32 %v1206, %v1207
    %v1209 = vrcp.pop 256.0
    %v1210 = vmul.f32 %v1208, %v1209
    %v1211 = vsel %vm1105, %v1210, -1e+30
    %1212 = vmax.xlane.f32.xlu0 %v1211
    %v1213 = vpop.xlane.xlu0 %1212
    %v1214 = vsub.f32 %v1211, %v1213
    %v1215 = vmul.f32 %v1214, 1.442695
    %v1216 = vpow.pop %v1215
    %v1217 = vsel %vm1105, %v1216, 0.0
    %1218 = vadd.xlane.f32.xlu0 %v1217
    %v1219 = vpop.xlane.xlu0 %1218
    %v1220 = vlog2.pop %v1219
    %v1221 = vmul.f32 %v1220, 0.6931472
    %v1222 = vadd.f32 %v1213, %v1221
    %s1223 = sld [smem:[#allocation3]]
    %v1224 = vstv %s1223
    %vm1225 = vcmp.eq.s32.totalorder %v1104, %v1224
    %v1226 = vsel %vm1225, %v1210, 0.0
    %1227 = vadd.xlane.f32.xlu0 %v1226
    %v1228 = vpop.xlane.xlu0 %1227
    %v1229 = vsub.f32 %v1222, %v1228
    %v1230 = vadd.f32 %v1229, 0.0
    %1231 = vxpose.xlu0.b32.start [1/16] %v977, 128
    %1232 = vxpose.xlu0.b32.cont [2/16] %v980, 128
    %1233 = vxpose.xlu0.b32.cont [3/16] %v985, 128
    %1234 = vxpose.xlu0.b32.cont [4/16] %v988, 128
    %1235 = vxpose.xlu0.b32.cont [5/16] %v993, 128
    %1236 = vxpose.xlu0.b32.cont [6/16] %v996, 128
    %1237 = vxpose.xlu0.b32.cont [7/16] %v1001, 128
    %1238 = vxpose.xlu0.b32.cont [8/16] %v1004, 128
    %1239 = vxpose.xlu0.b32.cont [9/16] %v1009, 128
    %1240 = vxpose.xlu0.b32.cont [10/16] %v1012, 128
    %1241 = vxpose.xlu0.b32.cont [11/16] %v1017, 128
    %1242 = vxpose.xlu0.b32.cont [12/16] %v1020, 128
    %1243 = vxpose.xlu0.b32.cont [13/16] %v1025, 128
    %1244 = vxpose.xlu0.b32.cont [14/16] %v1028, 128
    %1245 = vxpose.xlu0.b32.cont [15/16] %v1033, 128
    %1246 = vxpose.xlu0.b32.end [16/16] %v1036, 128
    %v1247 = vpop.trf.xlu0
    %v1248 = vpop.trf.xlu0
    %v1249 = vpop.trf.xlu0
    %v1250 = vpop.trf.xlu0
    %v1251 = vpop.trf.xlu0
    %v1252 = vpop.trf.xlu0
    %v1253 = vpop.trf.xlu0
    %v1254 = vpop.trf.xlu0
    %v1255 = vpop.trf.xlu0
    %v1256 = vpop.trf.xlu0
    %v1257 = vpop.trf.xlu0
    %v1258 = vpop.trf.xlu0
    %v1259 = vpop.trf.xlu0
    %v1260 = vpop.trf.xlu0
    %v1261 = vpop.trf.xlu0
    %v1262 = vpop.trf.xlu0
    %1263 = vxpose.xlu0.b32.start [1/16] %v1041, 128
    %1264 = vxpose.xlu0.b32.cont [2/16] %v1044, 128
    %1265 = vxpose.xlu0.b32.cont [3/16] %v1049, 128
    %1266 = vxpose.xlu0.b32.cont [4/16] %v1052, 128
    %1267 = vxpose.xlu0.b32.cont [5/16] %v1057, 128
    %1268 = vxpose.xlu0.b32.cont [6/16] %v1060, 128
    %1269 = vxpose.xlu0.b32.cont [7/16] %v1065, 128
    %1270 = vxpose.xlu0.b32.cont [8/16] %v1068, 128
    %1271 = vxpose.xlu0.b32.cont [9/16] %v1073, 128
    %1272 = vxpose.xlu0.b32.cont [10/16] %v1076, 128
    %1273 = vxpose.xlu0.b32.cont [11/16] %v1081, 128
    %1274 = vxpose.xlu0.b32.cont [12/16] %v1084, 128
    %1275 = vxpose.xlu0.b32.cont [13/16] %v1089, 128
    %1276 = vxpose.xlu0.b32.cont [14/16] %v1092, 128
    %1277 = vxpose.xlu0.b32.cont [15/16] %v1097, 128
    %1278 = vxpose.xlu0.b32.end [16/16] %v1100, 128
    %v1279 = vpop.trf.xlu0
    %v1280 = vpop.trf.xlu0
    %v1281 = vpop.trf.xlu0
    %v1282 = vpop.trf.xlu0
    %v1283 = vpop.trf.xlu0
    %v1284 = vpop.trf.xlu0
    %v1285 = vpop.trf.xlu0
    %v1286 = vpop.trf.xlu0
    %v1287 = vpop.trf.xlu0
    %v1288 = vpop.trf.xlu0
    %v1289 = vpop.trf.xlu0
    %v1290 = vpop.trf.xlu0
    %v1291 = vpop.trf.xlu0
    %v1292 = vpop.trf.xlu0
    %v1293 = vpop.trf.xlu0
    %v1294 = vpop.trf.xlu0
    %s1295 = scalar_lea.vmem %s6, 16
    %1296 = vst [vmem:[%s1295] sm:$0xff] %v1247
    %1297 = vst [vmem:[%s1295 + $0x8] sm:$0xff] %v1279
    %v1298 = vadd.f32 %v977, %v980
    %v1299 = vadd.f32 %v1298, %v985
    %v1300 = vadd.f32 %v1299, %v988
    %v1301 = vadd.f32 %v1300, %v993
    %v1302 = vadd.f32 %v1301, %v996
    %v1303 = vadd.f32 %v1302, %v1001
    %v1304 = vadd.f32 %v1303, %v1004
    %v1305 = vadd.f32 %v1304, %v1009
    %v1306 = vadd.f32 %v1305, %v1012
    %v1307 = vadd.f32 %v1306, %v1017
    %v1308 = vadd.f32 %v1307, %v1020
    %v1309 = vadd.f32 %v1308, %v1025
    %v1310 = vadd.f32 %v1309, %v1028
    %v1311 = vadd.f32 %v1310, %v1033
    %v1312 = vadd.f32 %v1311, %v1036
    %v1313 = vadd.f32 %v1312, %v1041
    %v1314 = vadd.f32 %v1313, %v1044
    %v1315 = vadd.f32 %v1314, %v1049
    %v1316 = vadd.f32 %v1315, %v1052
    %v1317 = vadd.f32 %v1316, %v1057
    %v1318 = vadd.f32 %v1317, %v1060
    %v1319 = vadd.f32 %v1318, %v1065
    %v1320 = vadd.f32 %v1319, %v1068
    %v1321 = vadd.f32 %v1320, %v1073
    %v1322 = vadd.f32 %v1321, %v1076
    %v1323 = vadd.f32 %v1322, %v1081
    %v1324 = vadd.f32 %v1323, %v1084
    %v1325 = vadd.f32 %v1324, %v1089
    %v1326 = vadd.f32 %v1325, %v1092
    %v1327 = vadd.f32 %v1326, %v1097
    %v1328 = vadd.f32 %v1327, %v1100
    %v1329 = vrot.slane %v1328, 4
    %v1330 = vadd.f32 %v1328, %v1329
    %v1331 = vrot.slane %v1330, 2
    %v1332 = vadd.f32 %v1330, %v1331
    %v1333 = vrot.slane %v1332, 1
    %v1334 = vadd.f32 %v1332, %v1333
    %v1335 = vmul.f32 %v1334, %v1209
    %v1336 = vsel %vm1105, %v1335, -1e+30
    %1337 = vmax.xlane.f32.xlu0 %v1336
    %v1338 = vpop.xlane.xlu0 %1337
    %v1339 = vsub.f32 %v1336, %v1338
    %v1340 = vmul.f32 %v1339, 1.442695
    %v1341 = vpow.pop %v1340
    %v1342 = vsel %vm1105, %v1341, 0.0
    %1343 = vadd.xlane.f32.xlu0 %v1342
    %v1344 = vpop.xlane.xlu0 %1343
    %v1345 = vlog2.pop %v1344
    %v1346 = vmul.f32 %v1345, 0.6931472
    %v1347 = vadd.f32 %v1338, %v1346
    %s1348 = sld [smem:[#allocation3 + $0x1]]
    %v1349 = vstv %s1348
    %vm1350 = vcmp.eq.s32.totalorder %v1104, %v1349
    %v1351 = vsel %vm1350, %v1335, 0.0
    %1352 = vadd.xlane.f32.xlu0 %v1351
    %v1353 = vpop.xlane.xlu0 %1352
    %v1354 = vsub.f32 %v1347, %v1353
    %v1355 = vadd.f32 %v1230, %v1354
    %v1356 = vrcp.pop 2.0
    %v1357 = vmul.f32 %v1355, %v1356
    %vm1358 = vcmask 0
    %1359 = vst.msk [vmem:[#allocation4] sm:$0x1] %vm1358, %v1357
    // Predicated region
    $region22: #{pretrained_model_forward.1} parent=1 // pred_check
      _
    $region23: #{pretrained_model_forward.1} parent=1 // pred_check_branch
      %1361 = sbr.rel (0) target = $region25
    $region24: #{pretrained_model_forward.1} parent=1 // pred_region
      _
    $region25: #{pretrained_model_forward.1} parent=1 // pred_fallthru
      _
    // Predicated region
    $region26: #{pretrained_model_forward.1} parent=1 // pred_check
      _
    $region27: #{pretrained_model_forward.1} parent=1 // pred_check_branch
      %1363 = sbr.rel (0) target = $region29
    $region28: #{pretrained_model_forward.1} parent=1 // pred_region
      %s1365 = ssub.s32 16, 16
      %1366 = vsyncadd [#allocation5], %s1365
      %s1368 = sshll.u32 [#allocation4], 4
      %s1369 = int_to_ptr.vmem [resolvable:$true] %s1368
      %1371 = dma.vmem_to_hbm [thread:$0]  %s1369, 16, %s7, [#allocation5]
    $region29: #{pretrained_model_forward.1} parent=1 // pred_fallthru
      _
    // Predicated region
    $region30: #{pretrained_model_forward.1} parent=1 // pred_check
      _
    $region31: #{pretrained_model_forward.1} parent=1 // pred_check_branch
      %1373 = sbr.rel (0) target = $region33
    $region32: #{pretrained_model_forward.1} parent=1 // pred_region
      _
    $region33: #{pretrained_model_forward.1} parent=1 // pred_fallthru
      _
    // Predicated region
    $region34: #{pretrained_model_forward.1} parent=1 // pred_check
      _
    $region35: #{pretrained_model_forward.1} parent=1 // pred_check_branch
      %1375 = sbr.rel (0) target = $region37
    $region36: #{pretrained_model_forward.1} parent=1 // pred_region
      %1376 = dma.done [#allocation5], 16
    $region37: #{pretrained_model_forward.1} parent=1 // pred_fallthru
      _
    %1377 = vsyncpa [#allocation5], 1

</llo_original>
